<compile_context>
chip_gen: v6e
topology: v6e:2x2x1
jax: 0.10.0
libtpu: 0.0.40
codegen_flags: <defaults>
</compile_context>

<pallas_src>
from functools import partial

import jax
import jax.numpy as jnp
from jax.experimental import pallas as pl
from jax.experimental.pallas import tpu as pltpu

LANE = 128      # TPU vreg lane width
SUBLANE = 8     # TPU vreg sublane count (f32)


def _round_up(x, m):
    return (x + m - 1) // m * m


def conv_relu_kernel(x_ref, w_ref, b_ref, o_ref):
    """One (batch, row-tile, Cout-tile) grid step.

    x_ref: (TH + kh - 1, Wp_t, Ci_p)   haloed input rows, channel-padded (VMEM)
    w_ref: (kh * kw * Ci_p, TC)        im2col weight slab for this Cout tile
    b_ref: (1, TC)                     f32 bias slice
    o_ref: (TH, Wo_t, TC)              lane-dense output tile
    """
    th, wo, tc = o_ref.shape
    hh, wp, ci = x_ref.shape
    kh = hh - th + 1
    kw = wp - wo + 1

    # im2col staging, built once per tile: (TH*Wo_t, kh*kw*Ci_p).
    # Each tap is a 128-lane-aligned slab, so the concat is cheap and the
    # reshape is tile-aligned (Wo_t % 8 == 0 guaranteed by the wrapper).
    taps = []
    for dy in range(kh):
        for dx in range(kw):
            taps.append(x_ref[dy:dy + th, dx:dx + wo, :])
    patches = jnp.concatenate(taps, axis=-1).reshape(th * wo, kh * kw * ci)

    # Single MXU matmul: M = TH*Wo_t, K = kh*kw*Ci_p, N = TC (128-multiple).
    acc = jnp.dot(patches, w_ref[...], preferred_element_type=jnp.float32)

    # f32 epilogue (bias + ReLU), then cast to the output dtype.
    acc = acc + b_ref[...].astype(jnp.float32)
    acc = jnp.maximum(acc, 0.0)
    o_ref[...] = acc.reshape(th, wo, tc).astype(o_ref.dtype)


def _pick_tile_h(Ho, Wo_t, kh, kw, Ci_p, K_tot, TC, in_isz, out_isz, budget):
    """Largest row tile whose double-buffered working set fits the VMEM budget."""
    def est(th):
        inp = 2 * (th + kh - 1) * (Wo_t + kw - 1) * Ci_p * in_isz
        wgt = 2 * K_tot * TC * in_isz
        outp = 2 * th * Wo_t * TC * out_isz
        patches = 2 * th * Wo_t * K_tot * in_isz   # im2col staging (+slack)
        acc = th * Wo_t * TC * 4
        return inp + wgt + outp + patches + acc

    th = max(1, min(Ho, 64))
    while th > 1 and est(th) > budget:
        th = max(1, th // 2)
    return th


def basic_conv2d(x_nchw, weight_oihw, bias, *, padding=(0, 0),
                 compute_dtype=None, tile_h=None, tile_cout=None,
                 vmem_budget_bytes=48 * 1024 * 1024):
    """Equivalent of BasicConv2d(in, out, kernel_size=k, padding=p).forward(x)."""
    N, Cin, H, W = map(int, x_nchw.shape)
    Cout, Cin_w, kh, kw = map(int, weight_oihw.shape)
    assert Cin == Cin_w, "grouped conv not supported"
    ph, pw = padding
    Ho = H + 2 * ph - kh + 1
    Wo = W + 2 * pw - kw + 1
    assert Ho > 0 and Wo > 0

    cdt = jnp.dtype(compute_dtype) if compute_dtype is not None else jnp.dtype(x_nchw.dtype)
    out_dtype = jnp.dtype(x_nchw.dtype)

    # Lane-dense channel padding (review: pad C to 128 multiples; for very
    # small Cin a W-fold layout would waste less MXU work — TODO(synk)).
    Ci_p = _round_up(Cin, LANE)
    Co_p = _round_up(Cout, LANE)
    Wo_t = _round_up(Wo, SUBLANE)          # sublane-aligned output width
    Wp_t = Wo_t + kw - 1
    K_tot = kh * kw * Ci_p

    # Cout tile: multiple of 128 that divides Co_p (default 256 for the
    # 256^2 MXUs on v6e/v7x; collapses to 128 when Co_p == 128).
    if tile_cout is None:
        tile_cout = 2 * LANE
    TC = min(_round_up(int(tile_cout), LANE), Co_p)
    while Co_p % TC:
        TC -= LANE
    nC = Co_p // TC

    # Row tile: VMEM-budgeted (v7x has 64 MiB VMEM; stay well under).
    if tile_h is None:
        TH = _pick_tile_h(Ho, Wo_t, kh, kw, Ci_p, K_tot, TC,
                          cdt.itemsize, out_dtype.itemsize,
                          int(0.75 * vmem_budget_bytes))
    else:
        TH = max(1, min(int(tile_h), Ho))
    Ho_t = _round_up(Ho, TH)
    nT = Ho_t // TH

    # ---- wrapper glue (fused by XLA under jit): NCHW->NHWC, one pad covering
    # spatial pad + row/col tile padding + channel padding, optional bf16 cast.
    x_nhwc = jnp.transpose(x_nchw, (0, 2, 3, 1)).astype(cdt)
    x_pad = jnp.pad(x_nhwc, ((0, 0),
                             (ph, ph + (Ho_t - Ho)),
                             (pw, pw + (Wo_t - Wo)),
                             (0, Ci_p - Cin)))
    # Halo-materialized row tiles: (N, nT, TH+kh-1, Wp_t, Ci_p).
    x_tiles = jnp.stack(
        [x_pad[:, i * TH: i * TH + TH + kh - 1] for i in range(nT)], axis=1)

    # im2col weight slab (kh*kw*Ci_p, Co_p), row order = (dy, dx, ci).
    w_hwio = jnp.transpose(weight_oihw, (2, 3, 1, 0)).astype(cdt)
    w_pad = jnp.pad(w_hwio, ((0, 0), (0, 0),
                             (0, Ci_p - Cin), (0, Co_p - Cout)))
    w_mat = w_pad.reshape(K_tot, Co_p)
    b_pad = jnp.pad(bias.astype(jnp.float32), (0, Co_p - Cout)).reshape(1, Co_p)

    out = pl.pallas_call(
        conv_relu_kernel,
        out_shape=jax.ShapeDtypeStruct((N, Ho_t, Wo_t, Co_p), out_dtype),
        grid_spec=pltpu.PrefetchScalarGridSpec(
            num_scalar_prefetch=0,
            grid=(N, nT, nC),
            in_specs=[
                pl.BlockSpec((None, None, TH + kh - 1, Wp_t, Ci_p),
                             lambda n, i, c: (n, i, 0, 0, 0)),
                pl.BlockSpec((K_tot, TC), lambda n, i, c: (0, c)),
                pl.BlockSpec((1, TC), lambda n, i, c: (0, c)),
            ],
            out_specs=pl.BlockSpec((None, TH, Wo_t, TC),
                                   lambda n, i, c: (n, i, 0, c)),
        ),
        compiler_params=pltpu.CompilerParams(
            dimension_semantics=("parallel", "parallel", "parallel"),
            vmem_limit_bytes=int(vmem_budget_bytes),
        ),
    )(x_tiles, w_mat, b_pad)

    # Strip padding, back to PyTorch's NCHW (kept for module-contract parity;
    # drop both transposes if the surrounding model is NHWC end-to-end).
    out = out[:, :Ho, :Wo, :Cout]
    return jnp.transpose(out, (0, 3, 1, 2))


def _ref_conv_relu(x, w, b, pad):
    y = jax.lax.conv_general_dilated(
        x, w, window_strides=(1, 1), padding=((pad, pad), (pad, pad)),
        dimension_numbers=("NCHW", "OIHW", "NCHW"))
    return jnp.maximum(y + b[None, :, None, None], 0.0)


def _make_params(key, N, Cin, H, W, Cout, k):
    kx, kw_, kb = jax.random.split(key, 3)
    x = jax.random.normal(kx, (N, Cin, H, W), dtype=jnp.float32)
    fan_in = Cin * k * k
    bound = 1.0 / (fan_in ** 0.5)
    weight = jax.random.uniform(kw_, (Cout, Cin, k, k), jnp.float32,
                                minval=-bound, maxval=bound)
    bias = jax.random.uniform(kb, (Cout,), jnp.float32,
                              minval=-bound, maxval=bound)
    return x, weight, bias


if __name__ == "__main__":
    key = jax.random.PRNGKey(0)
    k1, k2 = jax.random.split(key)

    # Config 1: BasicConv2d(4, 8, kernel_size=3, padding=1), f32.
    N, Cin, H, W, Cout, k, pad = 2, 4, 16, 16, 8, 3, 1
    x, weight, bias = _make_params(k1, N, Cin, H, W, Cout, k)
    f32_fn = jax.jit(partial(basic_conv2d, padding=(pad, pad), tile_h=8))
    out = jax.block_until_ready(f32_fn(x, weight, bias))
    ref = _ref_conv_relu(x, weight, bias, pad)
    assert out.shape == (N, Cout, H, W)
    assert jnp.allclose(out, ref, atol=1e-4, rtol=1e-4)

    # Config 2: same op with bf16 operands (f32 accumulation) — v6e/v7x path.
    bf16_fn = jax.jit(partial(basic_conv2d, padding=(pad, pad), tile_h=8,
                              compute_dtype=jnp.bfloat16))
    out_bf16 = jax.block_until_ready(bf16_fn(x, weight, bias))
    ref_bf16 = _ref_conv_relu(x.astype(jnp.bfloat16).astype(jnp.float32),
                              weight.astype(jnp.bfloat16).astype(jnp.float32),
                              bias, pad)
    assert jnp.allclose(out_bf16, ref_bf16, atol=2e-2, rtol=2e-2)

    # Config 3: ragged shapes (exercise row/width/channel padding paths).
    N3, Cin3, H3, W3, Cout3, k3, pad3 = 1, 3, 13, 13, 5, 5, 2
    x3, w3, b3 = _make_params(k2, N3, Cin3, H3, W3, Cout3, k3)
    f3 = jax.jit(partial(basic_conv2d, padding=(pad3, pad3), tile_h=4))
    out3 = jax.block_until_ready(f3(x3, w3, b3))
    ref3 = _ref_conv_relu(x3, w3, b3, pad3)
    assert out3.shape == (N3, Cout3, 13, 13)
    assert jnp.allclose(out3, ref3, atol=1e-4, rtol=1e-4)

    print("KERNEL_OK")
</pallas_src>

<mosaic_0001>
module attributes {stable_mosaic.version = 11 : i64} {
  func.func @conv_relu_kernel(%arg0: i32, %arg1: i32, %arg2: i32, %arg3: memref<1x1x10x18x128xf32, #tpu.memory_space<vmem>>, %arg4: memref<1152x128xf32, #tpu.memory_space<vmem>>, %arg5: memref<1x128xf32, #tpu.memory_space<vmem>>, %arg6: memref<1x8x16x128xf32, #tpu.memory_space<vmem>>) attributes {dimension_semantics = [#tpu.dimension_semantics<parallel>, #tpu.dimension_semantics<parallel>, #tpu.dimension_semantics<parallel>], iteration_bounds = array<i64: 2, 2, 1>, scalar_prefetch = 0 : i64, scratch_operands = 0 : i64, tpu.core_type = #tpu.core_type<tc>, window_params = [{transform_indices = @transform_0, window_bounds = array<i64: 1, 1, 10, 18, 128>}, {transform_indices = @transform_1, window_bounds = array<i64: 1152, 128>}, {transform_indices = @transform_2, window_bounds = array<i64: 1, 128>}, {transform_indices = @transform_3, window_bounds = array<i64: 1, 8, 16, 128>}]} {
    %c0 = arith.constant 0 : index
    %c0_0 = arith.constant 0 : index
    %c0_1 = arith.constant 0 : index
    %c0_2 = arith.constant 0 : index
    %c0_3 = arith.constant 0 : index
    %0 = vector.load %arg3[%c0, %c0_0, %c0_1, %c0_2, %c0_3] : memref<1x1x10x18x128xf32, #tpu.memory_space<vmem>>, vector<1x1x8x16x128xf32>
    %1 = vector.shape_cast %0 : vector<1x1x8x16x128xf32> to vector<8x16x128xf32>
    %c0_4 = arith.constant 0 : index
    %c0_5 = arith.constant 0 : index
    %c0_6 = arith.constant 0 : index
    %c1 = arith.constant 1 : index
    %c0_7 = arith.constant 0 : index
    %2 = vector.load %arg3[%c0_4, %c0_5, %c0_6, %c1, %c0_7] : memref<1x1x10x18x128xf32, #tpu.memory_space<vmem>>, vector<1x1x8x16x128xf32>
    %3 = vector.shape_cast %2 : vector<1x1x8x16x128xf32> to vector<8x16x128xf32>
    %c0_8 = arith.constant 0 : index
    %c0_9 = arith.constant 0 : index
    %c0_10 = arith.constant 0 : index
    %c2 = arith.constant 2 : index
    %c0_11 = arith.constant 0 : index
    %4 = vector.load %arg3[%c0_8, %c0_9, %c0_10, %c2, %c0_11] : memref<1x1x10x18x128xf32, #tpu.memory_space<vmem>>, vector<1x1x8x16x128xf32>
    %5 = vector.shape_cast %4 : vector<1x1x8x16x128xf32> to vector<8x16x128xf32>
    %c0_12 = arith.constant 0 : index
    %c0_13 = arith.constant 0 : index
    %c1_14 = arith.constant 1 : index
    %c0_15 = arith.constant 0 : index
    %c0_16 = arith.constant 0 : index
    %6 = vector.load %arg3[%c0_12, %c0_13, %c1_14, %c0_15, %c0_16] : memref<1x1x10x18x128xf32, #tpu.memory_space<vmem>>, vector<1x1x8x16x128xf32>
    %7 = vector.shape_cast %6 : vector<1x1x8x16x128xf32> to vector<8x16x128xf32>
    %c0_17 = arith.constant 0 : index
    %c0_18 = arith.constant 0 : index
    %c1_19 = arith.constant 1 : index
    %c1_20 = arith.constant 1 : index
    %c0_21 = arith.constant 0 : index
    %8 = vector.load %arg3[%c0_17, %c0_18, %c1_19, %c1_20, %c0_21] : memref<1x1x10x18x128xf32, #tpu.memory_space<vmem>>, vector<1x1x8x16x128xf32>
    %9 = vector.shape_cast %8 : vector<1x1x8x16x128xf32> to vector<8x16x128xf32>
    %c0_22 = arith.constant 0 : index
    %c0_23 = arith.constant 0 : index
    %c1_24 = arith.constant 1 : index
    %c2_25 = arith.constant 2 : index
    %c0_26 = arith.constant 0 : index
    %10 = vector.load %arg3[%c0_22, %c0_23, %c1_24, %c2_25, %c0_26] : memref<1x1x10x18x128xf32, #tpu.memory_space<vmem>>, vector<1x1x8x16x128xf32>
    %11 = vector.shape_cast %10 : vector<1x1x8x16x128xf32> to vector<8x16x128xf32>
    %c0_27 = arith.constant 0 : index
    %c0_28 = arith.constant 0 : index
    %c2_29 = arith.constant 2 : index
    %c0_30 = arith.constant 0 : index
    %c0_31 = arith.constant 0 : index
    %12 = vector.load %arg3[%c0_27, %c0_28, %c2_29, %c0_30, %c0_31] : memref<1x1x10x18x128xf32, #tpu.memory_space<vmem>>, vector<1x1x8x16x128xf32>
    %13 = vector.shape_cast %12 : vector<1x1x8x16x128xf32> to vector<8x16x128xf32>
    %c0_32 = arith.constant 0 : index
    %c0_33 = arith.constant 0 : index
    %c2_34 = arith.constant 2 : index
    %c1_35 = arith.constant 1 : index
    %c0_36 = arith.constant 0 : index
    %14 = vector.load %arg3[%c0_32, %c0_33, %c2_34, %c1_35, %c0_36] : memref<1x1x10x18x128xf32, #tpu.memory_space<vmem>>, vector<1x1x8x16x128xf32>
    %15 = vector.shape_cast %14 : vector<1x1x8x16x128xf32> to vector<8x16x128xf32>
    %c0_37 = arith.constant 0 : index
    %c0_38 = arith.constant 0 : index
    %c2_39 = arith.constant 2 : index
    %c2_40 = arith.constant 2 : index
    %c0_41 = arith.constant 0 : index
    %16 = vector.load %arg3[%c0_37, %c0_38, %c2_39, %c2_40, %c0_41] : memref<1x1x10x18x128xf32, #tpu.memory_space<vmem>>, vector<1x1x8x16x128xf32>
    %17 = vector.shape_cast %16 : vector<1x1x8x16x128xf32> to vector<8x16x128xf32>
    %18 = tpu.concatenate %1, %3, %5, %7, %9, %11, %13, %15, %17 in 2 : vector<8x16x128xf32>, vector<8x16x128xf32>, vector<8x16x128xf32>, vector<8x16x128xf32>, vector<8x16x128xf32>, vector<8x16x128xf32>, vector<8x16x128xf32>, vector<8x16x128xf32>, vector<8x16x128xf32> -> vector<8x16x1152xf32>
    %19 = vector.shape_cast %18 : vector<8x16x1152xf32> to vector<128x1152xf32>
    %c0_42 = arith.constant 0 : index
    %c0_43 = arith.constant 0 : index
    %20 = vector.load %arg4[%c0_42, %c0_43] : memref<1152x128xf32, #tpu.memory_space<vmem>>, vector<1152x128xf32>
    %cst = arith.constant dense<0.000000e+00> : vector<128x128xf32>
    %21 = tpu.matmul %19, %20, %cst {dimension_numbers = #tpu.dot_dimension_numbers<[1], [0], [0], [1], [0, 0, 1, 1], [], []>} : vector<128x1152xf32>, vector<1152x128xf32>, vector<128x128xf32> -> vector<128x128xf32>
    %c0_44 = arith.constant 0 : index
    %c0_45 = arith.constant 0 : index
    %22 = vector.load %arg5[%c0_44, %c0_45] : memref<1x128xf32, #tpu.memory_space<vmem>>, vector<1x128xf32>
    %23 = vector.broadcast %22 : vector<1x128xf32> to vector<128x128xf32>
    %24 = arith.addf %21, %23 : vector<128x128xf32>
    %cst_46 = arith.constant 0.000000e+00 : f32
    %25 = vector.broadcast %cst_46 : f32 to vector<128x128xf32>
    %26 = arith.maximumf %24, %25 : vector<128x128xf32>
    %27 = vector.shape_cast %26 : vector<128x128xf32> to vector<8x16x128xf32>
    %c0_47 = arith.constant 0 : index
    %c0_48 = arith.constant 0 : index
    %c0_49 = arith.constant 0 : index
    %c0_50 = arith.constant 0 : index
    %28 = vector.load %arg6[%c0_47, %c0_48, %c0_49, %c0_50] : memref<1x8x16x128xf32, #tpu.memory_space<vmem>>, vector<1x8x16x128xf32>
    %29 = vector.shape_cast %28 : vector<1x8x16x128xf32> to vector<8x16x128xf32>
    %30 = vector.shape_cast %27 : vector<8x16x128xf32> to vector<1x8x16x128xf32>
    tpu.vector_store %arg6[%c0_47, %c0_48, %c0_49, %c0_50], %30 {strides = array<i32>} : memref<1x8x16x128xf32, #tpu.memory_space<vmem>>, vector<1x8x16x128xf32>,
    return
  }
  func.func @transform_0(%arg0: i32, %arg1: i32, %arg2: i32) -> (i32, i32, i32, i32, i32) {
    %c0_i32 = arith.constant 0 : i32
    %c0_i32_0 = arith.constant 0 : i32
    %c0_i32_1 = arith.constant 0 : i32
    %c0_i32_2 = arith.constant 0 : i32
    return %arg0, %arg1, %c0_i32, %c0_i32_0, %c0_i32_1 : i32, i32, i32, i32, i32
  }
  func.func @transform_1(%arg0: i32, %arg1: i32, %arg2: i32) -> (i32, i32) {
    %c0_i32 = arith.constant 0 : i32
    %c0_i32_0 = arith.constant 0 : i32
    return %c0_i32, %arg2 : i32, i32
  }
  func.func @transform_2(%arg0: i32, %arg1: i32, %arg2: i32) -> (i32, i32) {
    %c0_i32 = arith.constant 0 : i32
    %c0_i32_0 = arith.constant 0 : i32
    return %c0_i32, %arg2 : i32, i32
  }
  func.func @transform_3(%arg0: i32, %arg1: i32, %arg2: i32) -> (i32, i32, i32, i32) {
    %c0_i32 = arith.constant 0 : i32
    %c0_i32_0 = arith.constant 0 : i32
    return %arg0, %arg1, %c0_i32, %arg2 : i32, i32, i32, i32
  }
}

</mosaic_0001>

<llo_original>
// kernel: basic_conv2d.1
$region0: #{basic_conv2d.1}
  #allocation0 [shape = 'u32[]', space=smem, size = 0x4, offset = 0x4, fixed_abs, tag = 'smem constant byte address 0x4 - core index']
  #allocation1 [shape = 'u32[144,128]{1,0:T(1,128)}', space=vmem, size = 0x12000, scoped, tag = 'internal scratch']
  %s0 = inlined_call_operand.vmem [shape: f32[2,2,10,18,128], index: 0, kind: input, shape index: {}]
  %s1 = inlined_call_operand.vmem [shape: f32[1152,128], index: 1, kind: input, shape index: {}]
  %s2 = inlined_call_operand.vmem [shape: f32[1,128], index: 2, kind: input, shape index: {}]
  %s3 = inlined_call_operand.vmem [shape: f32[2,16,16,128], index: 3, kind: output, shape index: {}]
  %s4 = sld [smem:[#allocation0]]
  $region45: #{basic_conv2d.1} parent=0
    _
  %s6 = ssub.s32 1, %s4
  %s7 = scalar_select 0, %s6, %s4
  loop: start=0, step=1, limit=6
  $region2: #{basic_conv2d.1} parent=0 // loop_pre_header
    _
  $region3: #{basic_conv2d.1} parent=0 // loop_header
    %s9 = sphi 0, %s13
    %p10 = scmp.ge.s32.totalorder %s9, 6
    %s16 = sphi 0, %s35
    %s17 = sphi 0, %s31
    %s18 = sphi 0, %s27
    %s19 = sphi 0, %s16
    %s20 = sphi 0, %s17
    %s21 = sphi 0, %s18
    %s22 = sphi 0, %s19
    %s23 = sphi 0, %s20
    %s24 = sphi 0, %s21
    %s40 = sphi 0, %s42
    %s43 = sphi 0, %s40
    %s44 = sphi 0, %s43
    %s60 = sphi 0, %s44
    %s66 = sphi 0, %s68
    %s69 = sphi 0, %s66
    %s70 = sphi 0, %s69
    %s86 = sphi 0, %s70
    %s92 = sphi 0, %s94
    %s95 = sphi 0, %s92
    %s96 = sphi 0, %s95
    %s112 = sphi 0, %s96
    %s122 = sphi 0, %s124
    %s125 = sphi 0, %s122
    %s126 = sphi 0, %s125
    %s142 = sphi 0, %s126
  $region4: #{basic_conv2d.1} parent=0 // loop_header_branch
    %12 = sbr.rel (%p10) target = $region8
  $region5: #{basic_conv2d.1} parent=0 // loop_body
    %s14 = ssub.s32 %s9, 1
    %s15 = ssub.s32 %s9, 2
    %s25 = sadd.s32 1, %s18
    %p26 = scmp.ge.s32.totalorder %s25, 1
    %s27 = scalar_select %p26, 0, %s25
    %s28 = sadd.s32 1, %s17
    %s29 = scalar_select %p26, %s28, %s17
    %p30 = scmp.ge.s32.totalorder %s29, 2
    %s31 = scalar_select %p30, 0, %s29
    %s32 = sadd.s32 1, %s16
    %s33 = scalar_select %p30, %s32, %s16
    %p34 = scmp.ge.s32.totalorder %s33, 2
    %s35 = scalar_select %p34, 0, %s33
    %s36 = ssub.s32 %s16, %s35
    %s37 = ssub.s32 %s17, %s31
    %s38 = sor.u32 %s36, %s37
    %p39 = scmp.eq.s32.totalorder %s38, 0
    %s41 = sadd.s32 %s40, 1
    %s42 = scalar_select %p39, %s40, %s41
    %p45 = pneg %p39
    %p46 = scmp.eq.s32.totalorder %s9, 3
    %p47 = por %p45, %p46
    %p48 = scmp.ne.s32.totalorder %s40, %s43
    %p49 = scmp.eq.s32.totalorder %s9, 0
    %p50 = por %p48, %p49
    %p51 = scmp.ne.s32.totalorder %s40, %s43
    %p52 = scmp.eq.s32.totalorder %s14, 3
    %p53 = por %p51, %p52
    %p54 = scmp.ne.s32.totalorder %s43, %s44
    %p55 = scmp.eq.s32.totalorder %s14, 0
    %p56 = por %p54, %p55
    %p57 = scmp.ne.s32.totalorder %s43, %s44
    %p58 = scmp.eq.s32.totalorder %s15, 3
    %p59 = por %p57, %p58
    %p61 = scmp.ne.s32.totalorder %s44, %s60
    %p62 = scmp.eq.s32.totalorder %s15, 0
    %p63 = por %p61, %p62
    %s64 = ssub.s32 %s18, %s27
    %p65 = scmp.eq.s32.totalorder %s64, 0
    %s67 = sadd.s32 %s66, 1
    %s68 = scalar_select %p65, %s66, %s67
    %p71 = pneg %p65
    %p72 = scmp.eq.s32.totalorder %s9, 3
    %p73 = por %p71, %p72
    %p74 = scmp.ne.s32.totalorder %s66, %s69
    %p75 = scmp.eq.s32.totalorder %s9, 0
    %p76 = por %p74, %p75
    %p77 = scmp.ne.s32.totalorder %s66, %s69
    %p78 = scmp.eq.s32.totalorder %s14, 3
    %p79 = por %p77, %p78
    %p80 = scmp.ne.s32.totalorder %s69, %s70
    %p81 = scmp.eq.s32.totalorder %s14, 0
    %p82 = por %p80, %p81
    %p83 = scmp.ne.s32.totalorder %s69, %s70
    %p84 = scmp.eq.s32.totalorder %s15, 3
    %p85 = por %p83, %p84
    %p87 = scmp.ne.s32.totalorder %s70, %s86
    %p88 = scmp.eq.s32.totalorder %s15, 0
    %p89 = por %p87, %p88
    %s90 = ssub.s32 %s18, %s27
    %p91 = scmp.eq.s32.totalorder %s90, 0
    %s93 = sadd.s32 %s92, 1
    %s94 = scalar_select %p91, %s92, %s93
    %p97 = pneg %p91
    %p98 = scmp.eq.s32.totalorder %s9, 3
    %p99 = por %p97, %p98
    %p100 = scmp.ne.s32.totalorder %s92, %s95
    %p101 = scmp.eq.s32.totalorder %s9, 0
    %p102 = por %p100, %p101
    %p103 = scmp.ne.s32.totalorder %s92, %s95
    %p104 = scmp.eq.s32.totalorder %s14, 3
    %p105 = por %p103, %p104
    %p106 = scmp.ne.s32.totalorder %s95, %s96
    %p107 = scmp.eq.s32.totalorder %s14, 0
    %p108 = por %p106, %p107
    %p109 = scmp.ne.s32.totalorder %s95, %s96
    %p110 = scmp.eq.s32.totalorder %s15, 3
    %p111 = por %p109, %p110
    %p113 = scmp.ne.s32.totalorder %s96, %s112
    %p114 = scmp.eq.s32.totalorder %s15, 0
    %p115 = por %p113, %p114
    %s116 = ssub.s32 %s16, %s35
    %s117 = ssub.s32 %s17, %s31
    %s118 = sor.u32 %s116, %s117
    %s119 = ssub.s32 %s18, %s27
    %s120 = sor.u32 %s118, %s119
    %p121 = scmp.eq.s32.totalorder %s120, 0
    %s123 = sadd.s32 %s122, 1
    %s124 = scalar_select %p121, %s122, %s123
    %p127 = pneg %p121
    %p128 = scmp.eq.s32.totalorder %s9, 3
    %p129 = por %p127, %p128
    %p130 = scmp.ne.s32.totalorder %s122, %s125
    %p131 = scmp.eq.s32.totalorder %s9, 0
    %p132 = por %p130, %p131
    %p133 = scmp.ne.s32.totalorder %s122, %s125
    %p134 = scmp.eq.s32.totalorder %s14, 3
    %p135 = por %p133, %p134
    %p136 = scmp.ne.s32.totalorder %s125, %s126
    %p137 = scmp.eq.s32.totalorder %s14, 0
    %p138 = por %p136, %p137
    %p139 = scmp.ne.s32.totalorder %s125, %s126
    %p140 = scmp.eq.s32.totalorder %s15, 3
    %p141 = por %p139, %p140
    %p143 = scmp.ne.s32.totalorder %s126, %s142
    %p144 = scmp.eq.s32.totalorder %s15, 0
    %p145 = por %p143, %p144
    %p146 = scmp.le.s32.totalorder 1, %s9
    %p147 = scmp.lt.s32.totalorder %s9, 5
    %p148 = pnand %p146, %p147
    %p149 = pneg %p148
    // Predicated region
    $region9: #{basic_conv2d.1} parent=5 // pred_check
      _
    $region10: #{basic_conv2d.1} parent=5 // pred_check_branch
      %151 = sbr.rel (%p148) target = $region12
    $region11: #{basic_conv2d.1} parent=5 // pred_region
      %s152 = ssub.s32 %s9, 1
      // Predicated region
      $region13: #{basic_conv2d.1} parent=11 // pred_check
        %p153 = pneg %p82
      $region14: #{basic_conv2d.1} parent=11 // pred_check_branch
        %155 = sbr.rel (%p153) target = $region16
      $region15: #{basic_conv2d.1} parent=11 // pred_region
        %p156 = scmp.lt.s32.totalorder %s21, 0
        %s157 = scalar_select %p156, %s21, 0
        %s158 = smul.addr %s157, 8
        %s159 = scalar_lea.vmem %s1, %s158
      $region16: #{basic_conv2d.1} parent=11 // pred_fallthru
        _
      // Predicated region
      $region17: #{basic_conv2d.1} parent=11 // pred_check
        %p160 = pneg %p108
      $region18: #{basic_conv2d.1} parent=11 // pred_check_branch
        %162 = sbr.rel (%p160) target = $region20
      $region19: #{basic_conv2d.1} parent=11 // pred_region
        %p163 = scmp.lt.s32.totalorder %s21, 0
        %s164 = scalar_select %p163, %s21, 0
        %s165 = scalar_lea.vmem %s2, %s164
      $region20: #{basic_conv2d.1} parent=11 // pred_fallthru
        _
    $region12: #{basic_conv2d.1} parent=5 // pred_fallthru
      _
    %p166 = scmp.lt.s32.totalorder %s9, 4
    // Predicated region
    $region21: #{basic_conv2d.1} parent=5 // pred_check
      %p167 = pneg %p166
    $region22: #{basic_conv2d.1} parent=5 // pred_check_branch
      %169 = sbr.rel (%p167) target = $region24
    $region23: #{basic_conv2d.1} parent=5 // pred_region
      // Predicated region
      $region25: #{basic_conv2d.1} parent=23 // pred_check
        %p170 = pneg %p50
      $region26: #{basic_conv2d.1} parent=23 // pred_check_branch
        %172 = sbr.rel (%p170) target = $region28
      $region27: #{basic_conv2d.1} parent=23 // pred_region
        %p173 = scmp.lt.s32.totalorder %s16, 1
        %s174 = scalar_select %p173, %s16, 1
        %p175 = scmp.lt.s32.totalorder %s17, 1
        %s176 = scalar_select %p175, %s17, 1
        %s177 = smul.addr %s176, 30
        %s178 = smul.addr %s174, 60
        %s179 = sadd.s32 %s177, %s178
        %s180 = smul.addr %s179, 8
        %s181 = scalar_lea.vmem %s0, %s180
      $region28: #{basic_conv2d.1} parent=23 // pred_fallthru
        _
    $region24: #{basic_conv2d.1} parent=5 // pred_fallthru
      _
    %p182 = scmp.le.s32.totalorder 1, %s9
    %p183 = scmp.lt.s32.totalorder %s9, 5
    %p184 = pnand %p182, %p183
    %p185 = pneg %p184
    // Predicated region
    $region29: #{basic_conv2d.1} parent=5 // pred_check
      _
    $region30: #{basic_conv2d.1} parent=5 // pred_check_branch
      %187 = sbr.rel (%p184) target = $region32
    $region31: #{basic_conv2d.1} parent=5 // pred_region
      %s188 = ssub.s32 %s9, 1
      %p189 = scmp.lt.s32.totalorder %s19, 1
      %s190 = scalar_select %p189, %s19, 1
      %p191 = scmp.lt.s32.totalorder %s20, 1
      %s192 = scalar_select %p191, %s20, 1
      %s193 = smul.addr %s192, 30
      %s194 = smul.addr %s190, 60
      %s195 = sadd.s32 %s193, %s194
      %s196 = smul.addr %s195, 8
      %s197 = scalar_lea.vmem %s0, %s196
      %p198 = pneg %p56
      %p199 = pneg %p53
      %p200 = scmp.lt.s32.totalorder %s21, 0
      %s201 = scalar_select %p200, %s21, 0
      %s202 = smul.addr %s201, 8
      %s203 = scalar_lea.vmem %s1, %s202
      %p204 = pneg %p82
      %p205 = pneg %p79
      %p206 = scmp.lt.s32.totalorder %s21, 0
      %s207 = scalar_select %p206, %s21, 0
      %s208 = scalar_lea.vmem %s2, %s207
      %p209 = pneg %p108
      %p210 = pneg %p105
      %p211 = pneg %p138
      %p212 = pneg %p135
      %s213 = smul.u32 8, %s20
      %p214 = scmp.lt.s32.totalorder %s19, 1
      %s215 = scalar_select %p214, %s19, 1
      %p216 = scmp.lt.s32.totalorder %s213, 15
      %s217 = scalar_select %p216, %s213, 15
      %p218 = scmp.lt.s32.totalorder %s21, 0
      %s219 = scalar_select %p218, %s21, 0
      %s220 = smul.addr %s217, 2
      %s221 = sadd.s32 %s219, %s220
      %s222 = smul.addr %s215, 32
      %s223 = sadd.s32 %s221, %s222
      %s224 = smul.addr %s223, 8
      %s225 = scalar_lea.vmem %s3, %s224
      %p226 = scmp.lt.s32.totalorder %s19, 1
      %s227 = scalar_select %p226, %s19, 1
      %p228 = scmp.lt.s32.totalorder %s20, 1
      %s229 = scalar_select %p228, %s20, 1
      %s230 = smul.addr %s229, 30
      %s231 = smul.addr %s227, 60
      %s232 = sadd.s32 %s230, %s231
      %s233 = smul.addr %s232, 8
      %s234 = scalar_lea.vmem %s0, %s233
      %p235 = scmp.lt.s32.totalorder %s21, 0
      %s236 = scalar_select %p235, %s21, 0
      %s237 = smul.addr %s236, 8
      %s238 = scalar_lea.vmem %s1, %s237
      %p239 = scmp.lt.s32.totalorder %s21, 0
      %s240 = scalar_select %p239, %s21, 0
      %s241 = scalar_lea.vmem %s2, %s240
      %s242 = smul.u32 8, %s20
      %p243 = scmp.lt.s32.totalorder %s19, 1
      %s244 = scalar_select %p243, %s19, 1
      %p245 = scmp.lt.s32.totalorder %s242, 15
      %s246 = scalar_select %p245, %s242, 15
      %p247 = scmp.lt.s32.totalorder %s21, 0
      %s248 = scalar_select %p247, %s21, 0
      %s249 = smul.addr %s246, 2
      %s250 = sadd.s32 %s248, %s249
      %s251 = smul.addr %s244, 32
      %s252 = sadd.s32 %s250, %s251
      %s253 = smul.addr %s252, 8
      %s254 = scalar_lea.vmem %s3, %s253
      %s255 = smul.u32 8, %s20
      %v256 = vld [vmem:[%s234] sm:$0xff]
      %v257 = vld [vmem:[%s234 + $0x8] sm:$0xff]
      %v258 = vld [vmem:[%s234 + $0x18] sm:$0xff]
      %v259 = vld [vmem:[%s234 + $0x20] sm:$0xff]
      %v260 = vld [vmem:[%s234 + $0x30] sm:$0xff]
      %v261 = vld [vmem:[%s234 + $0x38] sm:$0xff]
      %v262 = vld [vmem:[%s234 + $0x48] sm:$0xff]
      %v263 = vld [vmem:[%s234 + $0x50] sm:$0xff]
      %v264 = vld [vmem:[%s234 + $0x60] sm:$0xff]
      %v265 = vld [vmem:[%s234 + $0x68] sm:$0xff]
      %v266 = vld [vmem:[%s234 + $0x78] sm:$0xff]
      %v267 = vld [vmem:[%s234 + $0x80] sm:$0xff]
      %v268 = vld [vmem:[%s234 + $0x90] sm:$0xff]
      %v269 = vld [vmem:[%s234 + $0x98] sm:$0xff]
      %v270 = vld [vmem:[%s234 + $0xa8] sm:$0xff]
      %v271 = vld [vmem:[%s234 + $0xb0] sm:$0xff]
      %v272 = vld [vmem:[%s234 + $0x1] sm:$0xff]
      %v273 = vld [vmem:[%s234 + $0x9] sm:$0xff]
      %v274 = vld [vmem:[%s234 + $0x19] sm:$0xff]
      %v275 = vld [vmem:[%s234 + $0x21] sm:$0xff]
      %v276 = vld [vmem:[%s234 + $0x31] sm:$0xff]
      %v277 = vld [vmem:[%s234 + $0x39] sm:$0xff]
      %v278 = vld [vmem:[%s234 + $0x49] sm:$0xff]
      %v279 = vld [vmem:[%s234 + $0x51] sm:$0xff]
      %v280 = vld [vmem:[%s234 + $0x61] sm:$0xff]
      %v281 = vld [vmem:[%s234 + $0x69] sm:$0xff]
      %v282 = vld [vmem:[%s234 + $0x79] sm:$0xff]
      %v283 = vld [vmem:[%s234 + $0x81] sm:$0xff]
      %v284 = vld [vmem:[%s234 + $0x91] sm:$0xff]
      %v285 = vld [vmem:[%s234 + $0x99] sm:$0xff]
      %v286 = vld [vmem:[%s234 + $0xa9] sm:$0xff]
      %v287 = vld [vmem:[%s234 + $0xb1] sm:$0xff]
      %v288 = vld [vmem:[%s234 + $0x2] sm:$0xff]
      %v289 = vld [vmem:[%s234 + $0xa] sm:$0xff]
      %v290 = vld [vmem:[%s234 + $0x1a] sm:$0xff]
      %v291 = vld [vmem:[%s234 + $0x22] sm:$0xff]
      %v292 = vld [vmem:[%s234 + $0x32] sm:$0xff]
      %v293 = vld [vmem:[%s234 + $0x3a] sm:$0xff]
      %v294 = vld [vmem:[%s234 + $0x4a] sm:$0xff]
      %v295 = vld [vmem:[%s234 + $0x52] sm:$0xff]
      %v296 = vld [vmem:[%s234 + $0x62] sm:$0xff]
      %v297 = vld [vmem:[%s234 + $0x6a] sm:$0xff]
      %v298 = vld [vmem:[%s234 + $0x7a] sm:$0xff]
      %v299 = vld [vmem:[%s234 + $0x82] sm:$0xff]
      %v300 = vld [vmem:[%s234 + $0x92] sm:$0xff]
      %v301 = vld [vmem:[%s234 + $0x9a] sm:$0xff]
      %v302 = vld [vmem:[%s234 + $0xaa] sm:$0xff]
      %v303 = vld [vmem:[%s234 + $0xb2] sm:$0xff]
      %s304 = scalar_lea.vmem %s234, 24
      %v305 = vld [vmem:[%s304] sm:$0xff]
      %v306 = vld [vmem:[%s304 + $0x8] sm:$0xff]
      %v307 = vld [vmem:[%s304 + $0x18] sm:$0xff]
      %v308 = vld [vmem:[%s304 + $0x20] sm:$0xff]
      %v309 = vld [vmem:[%s304 + $0x30] sm:$0xff]
      %v310 = vld [vmem:[%s304 + $0x38] sm:$0xff]
      %v311 = vld [vmem:[%s304 + $0x48] sm:$0xff]
      %v312 = vld [vmem:[%s304 + $0x50] sm:$0xff]
      %v313 = vld [vmem:[%s304 + $0x60] sm:$0xff]
      %v314 = vld [vmem:[%s304 + $0x68] sm:$0xff]
      %v315 = vld [vmem:[%s304 + $0x78] sm:$0xff]
      %v316 = vld [vmem:[%s304 + $0x80] sm:$0xff]
      %v317 = vld [vmem:[%s304 + $0x90] sm:$0xff]
      %v318 = vld [vmem:[%s304 + $0x98] sm:$0xff]
      %v319 = vld [vmem:[%s304 + $0xa8] sm:$0xff]
      %v320 = vld [vmem:[%s304 + $0xb0] sm:$0xff]
      %v321 = vld [vmem:[%s304 + $0x1] sm:$0xff]
      %v322 = vld [vmem:[%s304 + $0x9] sm:$0xff]
      %v323 = vld [vmem:[%s304 + $0x19] sm:$0xff]
      %v324 = vld [vmem:[%s304 + $0x21] sm:$0xff]
      %v325 = vld [vmem:[%s304 + $0x31] sm:$0xff]
      %v326 = vld [vmem:[%s304 + $0x39] sm:$0xff]
      %v327 = vld [vmem:[%s304 + $0x49] sm:$0xff]
      %v328 = vld [vmem:[%s304 + $0x51] sm:$0xff]
      %v329 = vld [vmem:[%s304 + $0x61] sm:$0xff]
      %v330 = vld [vmem:[%s304 + $0x69] sm:$0xff]
      %v331 = vld [vmem:[%s304 + $0x79] sm:$0xff]
      %v332 = vld [vmem:[%s304 + $0x81] sm:$0xff]
      %v333 = vld [vmem:[%s304 + $0x91] sm:$0xff]
      %v334 = vld [vmem:[%s304 + $0x99] sm:$0xff]
      %v335 = vld [vmem:[%s304 + $0xa9] sm:$0xff]
      %v336 = vld [vmem:[%s304 + $0xb1] sm:$0xff]
      %v337 = vld [vmem:[%s304 + $0x2] sm:$0xff]
      %v338 = vld [vmem:[%s304 + $0xa] sm:$0xff]
      %v339 = vld [vmem:[%s304 + $0x1a] sm:$0xff]
      %v340 = vld [vmem:[%s304 + $0x22] sm:$0xff]
      %v341 = vld [vmem:[%s304 + $0x32] sm:$0xff]
      %v342 = vld [vmem:[%s304 + $0x3a] sm:$0xff]
      %v343 = vld [vmem:[%s304 + $0x4a] sm:$0xff]
      %v344 = vld [vmem:[%s304 + $0x52] sm:$0xff]
      %v345 = vld [vmem:[%s304 + $0x62] sm:$0xff]
      %v346 = vld [vmem:[%s304 + $0x6a] sm:$0xff]
      %v347 = vld [vmem:[%s304 + $0x7a] sm:$0xff]
      %v348 = vld [vmem:[%s304 + $0x82] sm:$0xff]
      %v349 = vld [vmem:[%s304 + $0x92] sm:$0xff]
      %v350 = vld [vmem:[%s304 + $0x9a] sm:$0xff]
      %v351 = vld [vmem:[%s304 + $0xaa] sm:$0xff]
      %v352 = vld [vmem:[%s304 + $0xb2] sm:$0xff]
      %s353 = scalar_lea.vmem %s234, 48
      %v354 = vld [vmem:[%s353] sm:$0xff]
      %v355 = vld [vmem:[%s353 + $0x8] sm:$0xff]
      %v356 = vld [vmem:[%s353 + $0x18] sm:$0xff]
      %v357 = vld [vmem:[%s353 + $0x20] sm:$0xff]
      %v358 = vld [vmem:[%s353 + $0x30] sm:$0xff]
      %v359 = vld [vmem:[%s353 + $0x38] sm:$0xff]
      %v360 = vld [vmem:[%s353 + $0x48] sm:$0xff]
      %v361 = vld [vmem:[%s353 + $0x50] sm:$0xff]
      %v362 = vld [vmem:[%s353 + $0x60] sm:$0xff]
      %v363 = vld [vmem:[%s353 + $0x68] sm:$0xff]
      %v364 = vld [vmem:[%s353 + $0x78] sm:$0xff]
      %v365 = vld [vmem:[%s353 + $0x80] sm:$0xff]
      %v366 = vld [vmem:[%s353 + $0x90] sm:$0xff]
      %v367 = vld [vmem:[%s353 + $0x98] sm:$0xff]
      %v368 = vld [vmem:[%s353 + $0xa8] sm:$0xff]
      %v369 = vld [vmem:[%s353 + $0xb0] sm:$0xff]
      %v370 = vld [vmem:[%s353 + $0x1] sm:$0xff]
      %v371 = vld [vmem:[%s353 + $0x9] sm:$0xff]
      %v372 = vld [vmem:[%s353 + $0x19] sm:$0xff]
      %v373 = vld [vmem:[%s353 + $0x21] sm:$0xff]
      %v374 = vld [vmem:[%s353 + $0x31] sm:$0xff]
      %v375 = vld [vmem:[%s353 + $0x39] sm:$0xff]
      %v376 = vld [vmem:[%s353 + $0x49] sm:$0xff]
      %v377 = vld [vmem:[%s353 + $0x51] sm:$0xff]
      %v378 = vld [vmem:[%s353 + $0x61] sm:$0xff]
      %v379 = vld [vmem:[%s353 + $0x69] sm:$0xff]
      %v380 = vld [vmem:[%s353 + $0x79] sm:$0xff]
      %v381 = vld [vmem:[%s353 + $0x81] sm:$0xff]
      %v382 = vld [vmem:[%s353 + $0x91] sm:$0xff]
      %v383 = vld [vmem:[%s353 + $0x99] sm:$0xff]
      %v384 = vld [vmem:[%s353 + $0xa9] sm:$0xff]
      %v385 = vld [vmem:[%s353 + $0xb1] sm:$0xff]
      %v386 = vld [vmem:[%s353 + $0x2] sm:$0xff]
      %v387 = vld [vmem:[%s353 + $0xa] sm:$0xff]
      %v388 = vld [vmem:[%s353 + $0x1a] sm:$0xff]
      %v389 = vld [vmem:[%s353 + $0x22] sm:$0xff]
      %v390 = vld [vmem:[%s353 + $0x32] sm:$0xff]
      %v391 = vld [vmem:[%s353 + $0x3a] sm:$0xff]
      %v392 = vld [vmem:[%s353 + $0x4a] sm:$0xff]
      %v393 = vld [vmem:[%s353 + $0x52] sm:$0xff]
      %v394 = vld [vmem:[%s353 + $0x62] sm:$0xff]
      %v395 = vld [vmem:[%s353 + $0x6a] sm:$0xff]
      %v396 = vld [vmem:[%s353 + $0x7a] sm:$0xff]
      %v397 = vld [vmem:[%s353 + $0x82] sm:$0xff]
      %v398 = vld [vmem:[%s353 + $0x92] sm:$0xff]
      %v399 = vld [vmem:[%s353 + $0x9a] sm:$0xff]
      %v400 = vld [vmem:[%s353 + $0xaa] sm:$0xff]
      %v401 = vld [vmem:[%s353 + $0xb2] sm:$0xff]
      %v402 = vld [vmem:[%s238] sm:$0xff]
      %v403 = vld [vmem:[%s238 + $0x8] sm:$0xff]
      %v404 = vld [vmem:[%s238 + $0x10] sm:$0xff]
      %v405 = vld [vmem:[%s238 + $0x18] sm:$0xff]
      %v406 = vld [vmem:[%s238 + $0x20] sm:$0xff]
      %v407 = vld [vmem:[%s238 + $0x28] sm:$0xff]
      %v408 = vld [vmem:[%s238 + $0x30] sm:$0xff]
      %v409 = vld [vmem:[%s238 + $0x38] sm:$0xff]
      %v410 = vld [vmem:[%s238 + $0x40] sm:$0xff]
      %v411 = vld [vmem:[%s238 + $0x48] sm:$0xff]
      %v412 = vld [vmem:[%s238 + $0x50] sm:$0xff]
      %v413 = vld [vmem:[%s238 + $0x58] sm:$0xff]
      %v414 = vld [vmem:[%s238 + $0x60] sm:$0xff]
      %v415 = vld [vmem:[%s238 + $0x68] sm:$0xff]
      %v416 = vld [vmem:[%s238 + $0x70] sm:$0xff]
      %v417 = vld [vmem:[%s238 + $0x78] sm:$0xff]
      %v418 = vld [vmem:[%s238 + $0x80] sm:$0xff]
      %v419 = vld [vmem:[%s238 + $0x88] sm:$0xff]
      %v420 = vld [vmem:[%s238 + $0x90] sm:$0xff]
      %v421 = vld [vmem:[%s238 + $0x98] sm:$0xff]
      %v422 = vld [vmem:[%s238 + $0xa0] sm:$0xff]
      %v423 = vld [vmem:[%s238 + $0xa8] sm:$0xff]
      %v424 = vld [vmem:[%s238 + $0xb0] sm:$0xff]
      %v425 = vld [vmem:[%s238 + $0xb8] sm:$0xff]
      %v426 = vld [vmem:[%s238 + $0xc0] sm:$0xff]
      %v427 = vld [vmem:[%s238 + $0xc8] sm:$0xff]
      %v428 = vld [vmem:[%s238 + $0xd0] sm:$0xff]
      %v429 = vld [vmem:[%s238 + $0xd8] sm:$0xff]
      %v430 = vld [vmem:[%s238 + $0xe0] sm:$0xff]
      %v431 = vld [vmem:[%s238 + $0xe8] sm:$0xff]
      %v432 = vld [vmem:[%s238 + $0xf0] sm:$0xff]
      %v433 = vld [vmem:[%s238 + $0xf8] sm:$0xff]
      %v434 = vld [vmem:[%s238 + $0x100] sm:$0xff]
      %v435 = vld [vmem:[%s238 + $0x108] sm:$0xff]
      %v436 = vld [vmem:[%s238 + $0x110] sm:$0xff]
      %v437 = vld [vmem:[%s238 + $0x118] sm:$0xff]
      %v438 = vld [vmem:[%s238 + $0x120] sm:$0xff]
      %v439 = vld [vmem:[%s238 + $0x128] sm:$0xff]
      %v440 = vld [vmem:[%s238 + $0x130] sm:$0xff]
      %v441 = vld [vmem:[%s238 + $0x138] sm:$0xff]
      %v442 = vld [vmem:[%s238 + $0x140] sm:$0xff]
      %v443 = vld [vmem:[%s238 + $0x148] sm:$0xff]
      %v444 = vld [vmem:[%s238 + $0x150] sm:$0xff]
      %v445 = vld [vmem:[%s238 + $0x158] sm:$0xff]
      %v446 = vld [vmem:[%s238 + $0x160] sm:$0xff]
      %v447 = vld [vmem:[%s238 + $0x168] sm:$0xff]
      %v448 = vld [vmem:[%s238 + $0x170] sm:$0xff]
      %v449 = vld [vmem:[%s238 + $0x178] sm:$0xff]
      %v450 = vld [vmem:[%s238 + $0x180] sm:$0xff]
      %v451 = vld [vmem:[%s238 + $0x188] sm:$0xff]
      %v452 = vld [vmem:[%s238 + $0x190] sm:$0xff]
      %v453 = vld [vmem:[%s238 + $0x198] sm:$0xff]
      %v454 = vld [vmem:[%s238 + $0x1a0] sm:$0xff]
      %v455 = vld [vmem:[%s238 + $0x1a8] sm:$0xff]
      %v456 = vld [vmem:[%s238 + $0x1b0] sm:$0xff]
      %v457 = vld [vmem:[%s238 + $0x1b8] sm:$0xff]
      %v458 = vld [vmem:[%s238 + $0x1c0] sm:$0xff]
      %v459 = vld [vmem:[%s238 + $0x1c8] sm:$0xff]
      %v460 = vld [vmem:[%s238 + $0x1d0] sm:$0xff]
      %v461 = vld [vmem:[%s238 + $0x1d8] sm:$0xff]
      %v462 = vld [vmem:[%s238 + $0x1e0] sm:$0xff]
      %v463 = vld [vmem:[%s238 + $0x1e8] sm:$0xff]
      %v464 = vld [vmem:[%s238 + $0x1f0] sm:$0xff]
      %v465 = vld [vmem:[%s238 + $0x1f8] sm:$0xff]
      %v466 = vld [vmem:[%s238 + $0x200] sm:$0xff]
      %v467 = vld [vmem:[%s238 + $0x208] sm:$0xff]
      %v468 = vld [vmem:[%s238 + $0x210] sm:$0xff]
      %v469 = vld [vmem:[%s238 + $0x218] sm:$0xff]
      %v470 = vld [vmem:[%s238 + $0x220] sm:$0xff]
      %v471 = vld [vmem:[%s238 + $0x228] sm:$0xff]
      %v472 = vld [vmem:[%s238 + $0x230] sm:$0xff]
      %v473 = vld [vmem:[%s238 + $0x238] sm:$0xff]
      %v474 = vld [vmem:[%s238 + $0x240] sm:$0xff]
      %v475 = vld [vmem:[%s238 + $0x248] sm:$0xff]
      %v476 = vld [vmem:[%s238 + $0x250] sm:$0xff]
      %v477 = vld [vmem:[%s238 + $0x258] sm:$0xff]
      %v478 = vld [vmem:[%s238 + $0x260] sm:$0xff]
      %v479 = vld [vmem:[%s238 + $0x268] sm:$0xff]
      %v480 = vld [vmem:[%s238 + $0x270] sm:$0xff]
      %v481 = vld [vmem:[%s238 + $0x278] sm:$0xff]
      %v482 = vld [vmem:[%s238 + $0x280] sm:$0xff]
      %v483 = vld [vmem:[%s238 + $0x288] sm:$0xff]
      %v484 = vld [vmem:[%s238 + $0x290] sm:$0xff]
      %v485 = vld [vmem:[%s238 + $0x298] sm:$0xff]
      %v486 = vld [vmem:[%s238 + $0x2a0] sm:$0xff]
      %v487 = vld [vmem:[%s238 + $0x2a8] sm:$0xff]
      %v488 = vld [vmem:[%s238 + $0x2b0] sm:$0xff]
      %v489 = vld [vmem:[%s238 + $0x2b8] sm:$0xff]
      %v490 = vld [vmem:[%s238 + $0x2c0] sm:$0xff]
      %v491 = vld [vmem:[%s238 + $0x2c8] sm:$0xff]
      %v492 = vld [vmem:[%s238 + $0x2d0] sm:$0xff]
      %v493 = vld [vmem:[%s238 + $0x2d8] sm:$0xff]
      %v494 = vld [vmem:[%s238 + $0x2e0] sm:$0xff]
      %v495 = vld [vmem:[%s238 + $0x2e8] sm:$0xff]
      %v496 = vld [vmem:[%s238 + $0x2f0] sm:$0xff]
      %v497 = vld [vmem:[%s238 + $0x2f8] sm:$0xff]
      %v498 = vld [vmem:[%s238 + $0x300] sm:$0xff]
      %v499 = vld [vmem:[%s238 + $0x308] sm:$0xff]
      %v500 = vld [vmem:[%s238 + $0x310] sm:$0xff]
      %v501 = vld [vmem:[%s238 + $0x318] sm:$0xff]
      %v502 = vld [vmem:[%s238 + $0x320] sm:$0xff]
      %v503 = vld [vmem:[%s238 + $0x328] sm:$0xff]
      %v504 = vld [vmem:[%s238 + $0x330] sm:$0xff]
      %v505 = vld [vmem:[%s238 + $0x338] sm:$0xff]
      %v506 = vld [vmem:[%s238 + $0x340] sm:$0xff]
      %v507 = vld [vmem:[%s238 + $0x348] sm:$0xff]
      %v508 = vld [vmem:[%s238 + $0x350] sm:$0xff]
      %v509 = vld [vmem:[%s238 + $0x358] sm:$0xff]
      %v510 = vld [vmem:[%s238 + $0x360] sm:$0xff]
      %v511 = vld [vmem:[%s238 + $0x368] sm:$0xff]
      %v512 = vld [vmem:[%s238 + $0x370] sm:$0xff]
      %v513 = vld [vmem:[%s238 + $0x378] sm:$0xff]
      %v514 = vld [vmem:[%s238 + $0x380] sm:$0xff]
      %v515 = vld [vmem:[%s238 + $0x388] sm:$0xff]
      %v516 = vld [vmem:[%s238 + $0x390] sm:$0xff]
      %v517 = vld [vmem:[%s238 + $0x398] sm:$0xff]
      %v518 = vld [vmem:[%s238 + $0x3a0] sm:$0xff]
      %v519 = vld [vmem:[%s238 + $0x3a8] sm:$0xff]
      %v520 = vld [vmem:[%s238 + $0x3b0] sm:$0xff]
      %v521 = vld [vmem:[%s238 + $0x3b8] sm:$0xff]
      %v522 = vld [vmem:[%s238 + $0x3c0] sm:$0xff]
      %v523 = vld [vmem:[%s238 + $0x3c8] sm:$0xff]
      %v524 = vld [vmem:[%s238 + $0x3d0] sm:$0xff]
      %v525 = vld [vmem:[%s238 + $0x3d8] sm:$0xff]
      %v526 = vld [vmem:[%s238 + $0x3e0] sm:$0xff]
      %v527 = vld [vmem:[%s238 + $0x3e8] sm:$0xff]
      %v528 = vld [vmem:[%s238 + $0x3f0] sm:$0xff]
      %v529 = vld [vmem:[%s238 + $0x3f8] sm:$0xff]
      %v530 = vld [vmem:[%s238 + $0x400] sm:$0xff]
      %v531 = vld [vmem:[%s238 + $0x408] sm:$0xff]
      %v532 = vld [vmem:[%s238 + $0x410] sm:$0xff]
      %v533 = vld [vmem:[%s238 + $0x418] sm:$0xff]
      %v534 = vld [vmem:[%s238 + $0x420] sm:$0xff]
      %v535 = vld [vmem:[%s238 + $0x428] sm:$0xff]
      %v536 = vld [vmem:[%s238 + $0x430] sm:$0xff]
      %v537 = vld [vmem:[%s238 + $0x438] sm:$0xff]
      %v538 = vld [vmem:[%s238 + $0x440] sm:$0xff]
      %v539 = vld [vmem:[%s238 + $0x448] sm:$0xff]
      %v540 = vld [vmem:[%s238 + $0x450] sm:$0xff]
      %v541 = vld [vmem:[%s238 + $0x458] sm:$0xff]
      %v542 = vld [vmem:[%s238 + $0x460] sm:$0xff]
      %v543 = vld [vmem:[%s238 + $0x468] sm:$0xff]
      %v544 = vld [vmem:[%s238 + $0x470] sm:$0xff]
      %v545 = vld [vmem:[%s238 + $0x478] sm:$0xff]
      %v546 = vld [vmem:[%s241] sm:$0x1]
      %v548 = vlaneseq
      %v549 = vshrl.u32 %v548, 7
      %v550 = vsub.s32 0, %v549
      %v551 = vrot.slane %v546, %v550
      %553 = vmatprep.subr.mxu0 0.0
      %554 = vmatpush1.msra.mxu0 %v417
      %555 = vmatprep.subr.mxu0 0.0
      %556 = vmatpush1.msra.mxu0 %v416
      %557 = vmatprep.subr.mxu0 0.0
      %558 = vmatpush1.msra.mxu0 %v415
      %559 = vmatprep.subr.mxu0 0.0
      %560 = vmatpush1.msra.mxu0 %v414
      %561 = vmatprep.subr.mxu0 0.0
      %562 = vmatpush1.msra.mxu0 %v413
      %563 = vmatprep.subr.mxu0 0.0
      %564 = vmatpush1.msra.mxu0 %v412
      %565 = vmatprep.subr.mxu0 0.0
      %566 = vmatpush1.msra.mxu0 %v411
      %567 = vmatprep.subr.mxu0 0.0
      %568 = vmatpush1.msra.mxu0 %v410
      %569 = vmatprep.subr.mxu0 0.0
      %570 = vmatpush1.msra.mxu0 %v409
      %571 = vmatprep.subr.mxu0 0.0
      %572 = vmatpush1.msra.mxu0 %v408
      %573 = vmatprep.subr.mxu0 0.0
      %574 = vmatpush1.msra.mxu0 %v407
      %575 = vmatprep.subr.mxu0 0.0
      %576 = vmatpush1.msra.mxu0 %v406
      %577 = vmatprep.subr.mxu0 0.0
      %578 = vmatpush1.msra.mxu0 %v405
      %579 = vmatprep.subr.mxu0 0.0
      %580 = vmatpush1.msra.mxu0 %v404
      %581 = vmatprep.subr.mxu0 0.0
      %582 = vmatpush1.msra.mxu0 %v403
      %583 = vmatprep.subr.mxu0 0.0
      %584 = vmatpush1.msra.mxu0 %v402
      %585 = vmatprep.subr.mxu0 0.0
      %586 = vmatpush2.msra.mxu0 %v433
      %587 = vmatprep.subr.mxu0 0.0
      %588 = vmatpush2.msra.mxu0 %v432
      %589 = vmatprep.subr.mxu0 0.0
      %590 = vmatpush2.msra.mxu0 %v431
      %591 = vmatprep.subr.mxu0 0.0
      %592 = vmatpush2.msra.mxu0 %v430
      %593 = vmatprep.subr.mxu0 0.0
      %594 = vmatpush2.msra.mxu0 %v429
      %595 = vmatprep.subr.mxu0 0.0
      %596 = vmatpush2.msra.mxu0 %v428
      %597 = vmatprep.subr.mxu0 0.0
      %598 = vmatpush2.msra.mxu0 %v427
      %599 = vmatprep.subr.mxu0 0.0
      %600 = vmatpush2.msra.mxu0 %v426
      %601 = vmatprep.subr.mxu0 0.0
      %602 = vmatpush2.msra.mxu0 %v425
      %603 = vmatprep.subr.mxu0 0.0
      %604 = vmatpush2.msra.mxu0 %v424
      %605 = vmatprep.subr.mxu0 0.0
      %606 = vmatpush2.msra.mxu0 %v423
      %607 = vmatprep.subr.mxu0 0.0
      %608 = vmatpush2.msra.mxu0 %v422
      %609 = vmatprep.subr.mxu0 0.0
      %610 = vmatpush2.msra.mxu0 %v421
      %611 = vmatprep.subr.mxu0 0.0
      %612 = vmatpush2.msra.mxu0 %v420
      %613 = vmatprep.subr.mxu0 0.0
      %614 = vmatpush2.msra.mxu0 %v419
      %615 = vmatprep.subr.mxu0 0.0
      %616 = vmatpush2.msra.mxu0 %v418
      %617 = vmatprep.mubr.f32.mxu0 %v272
      %618 = vmatmul.mubr.f32.gmra.mxu0 %v256
      %v619 = vpop.f32.mrf.mxu0
      %v620 = vadd.f32 %v551, %v619
      %v621 = vpop.f32.mrf.mxu0
      %622 = vmatprep.mubr.f32.mxu0 %v273
      %623 = vmatmul.mubr.f32.gmra.mxu0 %v257
      %v624 = vpop.f32.mrf.mxu0
      %v625 = vadd.f32 %v551, %v624
      %v626 = vpop.f32.mrf.mxu0
      %627 = vmatprep.mubr.f32.mxu0 %v274
      %628 = vmatmul.mubr.f32.gmra.mxu0 %v258
      %v629 = vpop.f32.mrf.mxu0
      %v630 = vadd.f32 %v551, %v629
      %v631 = vpop.f32.mrf.mxu0
      %632 = vmatprep.mubr.f32.mxu0 %v275
      %633 = vmatmul.mubr.f32.gmra.mxu0 %v259
      %v634 = vpop.f32.mrf.mxu0
      %v635 = vadd.f32 %v551, %v634
      %v636 = vpop.f32.mrf.mxu0
      %637 = vmatprep.mubr.f32.mxu0 %v276
      %638 = vmatmul.mubr.f32.gmra.mxu0 %v260
      %v639 = vpop.f32.mrf.mxu0
      %v640 = vadd.f32 %v551, %v639
      %v641 = vpop.f32.mrf.mxu0
      %642 = vmatprep.mubr.f32.mxu0 %v277
      %643 = vmatmul.mubr.f32.gmra.mxu0 %v261
      %v644 = vpop.f32.mrf.mxu0
      %v645 = vadd.f32 %v551, %v644
      %v646 = vpop.f32.mrf.mxu0
      %647 = vmatprep.mubr.f32.mxu0 %v278
      %648 = vmatmul.mubr.f32.gmra.mxu0 %v262
      %v649 = vpop.f32.mrf.mxu0
      %v650 = vadd.f32 %v551, %v649
      %v651 = vpop.f32.mrf.mxu0
      %652 = vmatprep.mubr.f32.mxu0 %v279
      %653 = vmatmul.mubr.f32.gmra.mxu0 %v263
      %v654 = vpop.f32.mrf.mxu0
      %v655 = vadd.f32 %v551, %v654
      %v656 = vpop.f32.mrf.mxu0
      %657 = vmatprep.mubr.f32.mxu0 %v280
      %658 = vmatmul.mubr.f32.gmra.mxu0 %v264
      %v659 = vpop.f32.mrf.mxu0
      %v660 = vadd.f32 %v551, %v659
      %v661 = vpop.f32.mrf.mxu0
      %662 = vmatprep.mubr.f32.mxu0 %v281
      %663 = vmatmul.mubr.f32.gmra.mxu0 %v265
      %v664 = vpop.f32.mrf.mxu0
      %v665 = vadd.f32 %v551, %v664
      %v666 = vpop.f32.mrf.mxu0
      %667 = vmatprep.mubr.f32.mxu0 %v282
      %668 = vmatmul.mubr.f32.gmra.mxu0 %v266
      %v669 = vpop.f32.mrf.mxu0
      %v670 = vadd.f32 %v551, %v669
      %v671 = vpop.f32.mrf.mxu0
      %672 = vmatprep.mubr.f32.mxu0 %v283
      %673 = vmatmul.mubr.f32.gmra.mxu0 %v267
      %v674 = vpop.f32.mrf.mxu0
      %v675 = vadd.f32 %v551, %v674
      %v676 = vpop.f32.mrf.mxu0
      %677 = vmatprep.mubr.f32.mxu0 %v284
      %678 = vmatmul.mubr.f32.gmra.mxu0 %v268
      %v679 = vpop.f32.mrf.mxu0
      %v680 = vadd.f32 %v551, %v679
      %v681 = vpop.f32.mrf.mxu0
      %682 = vmatprep.mubr.f32.mxu0 %v285
      %683 = vmatmul.mubr.f32.gmra.mxu0 %v269
      %v684 = vpop.f32.mrf.mxu0
      %v685 = vadd.f32 %v551, %v684
      %v686 = vpop.f32.mrf.mxu0
      %687 = vmatprep.mubr.f32.mxu0 %v286
      %688 = vmatmul.mubr.f32.gmra.mxu0 %v270
      %v689 = vpop.f32.mrf.mxu0
      %v690 = vadd.f32 %v551, %v689
      %v691 = vpop.f32.mrf.mxu0
      %692 = vmatprep.mubr.f32.mxu0 %v287
      %693 = vmatmul.mubr.f32.gmra.mxu0 %v271
      %v694 = vpop.f32.mrf.mxu0
      %v695 = vadd.f32 %v551, %v694
      %v696 = vpop.f32.mrf.mxu0
      %697 = vdwg.mxu0
      %698 = vmatprep.subr.mxu0 0.0
      %699 = vmatpush1.msra.mxu0 %v449
      %700 = vmatprep.subr.mxu0 0.0
      %701 = vmatpush1.msra.mxu0 %v448
      %702 = vmatprep.subr.mxu0 0.0
      %703 = vmatpush1.msra.mxu0 %v447
      %704 = vmatprep.subr.mxu0 0.0
      %705 = vmatpush1.msra.mxu0 %v446
      %706 = vmatprep.subr.mxu0 0.0
      %707 = vmatpush1.msra.mxu0 %v445
      %708 = vmatprep.subr.mxu0 0.0
      %709 = vmatpush1.msra.mxu0 %v444
      %710 = vmatprep.subr.mxu0 0.0
      %711 = vmatpush1.msra.mxu0 %v443
      %712 = vmatprep.subr.mxu0 0.0
      %713 = vmatpush1.msra.mxu0 %v442
      %714 = vmatprep.subr.mxu0 0.0
      %715 = vmatpush1.msra.mxu0 %v441
      %716 = vmatprep.subr.mxu0 0.0
      %717 = vmatpush1.msra.mxu0 %v440
      %718 = vmatprep.subr.mxu0 0.0
      %719 = vmatpush1.msra.mxu0 %v439
      %720 = vmatprep.subr.mxu0 0.0
      %721 = vmatpush1.msra.mxu0 %v438
      %722 = vmatprep.subr.mxu0 0.0
      %723 = vmatpush1.msra.mxu0 %v437
      %724 = vmatprep.subr.mxu0 0.0
      %725 = vmatpush1.msra.mxu0 %v436
      %726 = vmatprep.subr.mxu0 0.0
      %727 = vmatpush1.msra.mxu0 %v435
      %728 = vmatprep.subr.mxu0 0.0
      %729 = vmatpush1.msra.mxu0 %v434
      %730 = vmatprep.subr.mxu0 0.0
      %731 = vmatpush2.msra.mxu0 %v465
      %732 = vmatprep.subr.mxu0 0.0
      %733 = vmatpush2.msra.mxu0 %v464
      %734 = vmatprep.subr.mxu0 0.0
      %735 = vmatpush2.msra.mxu0 %v463
      %736 = vmatprep.subr.mxu0 0.0
      %737 = vmatpush2.msra.mxu0 %v462
      %738 = vmatprep.subr.mxu0 0.0
      %739 = vmatpush2.msra.mxu0 %v461
      %740 = vmatprep.subr.mxu0 0.0
      %741 = vmatpush2.msra.mxu0 %v460
      %742 = vmatprep.subr.mxu0 0.0
      %743 = vmatpush2.msra.mxu0 %v459
      %744 = vmatprep.subr.mxu0 0.0
      %745 = vmatpush2.msra.mxu0 %v458
      %746 = vmatprep.subr.mxu0 0.0
      %747 = vmatpush2.msra.mxu0 %v457
      %748 = vmatprep.subr.mxu0 0.0
      %749 = vmatpush2.msra.mxu0 %v456
      %750 = vmatprep.subr.mxu0 0.0
      %751 = vmatpush2.msra.mxu0 %v455
      %752 = vmatprep.subr.mxu0 0.0
      %753 = vmatpush2.msra.mxu0 %v454
      %754 = vmatprep.subr.mxu0 0.0
      %755 = vmatpush2.msra.mxu0 %v453
      %756 = vmatprep.subr.mxu0 0.0
      %757 = vmatpush2.msra.mxu0 %v452
      %758 = vmatprep.subr.mxu0 0.0
      %759 = vmatpush2.msra.mxu0 %v451
      %760 = vmatprep.subr.mxu0 0.0
      %761 = vmatpush2.msra.mxu0 %v450
      %762 = vmatprep.mubr.f32.mxu0 %v305
      %763 = vmatmul.mubr.f32.gmra.mxu0 %v288
      %v764 = vpop.f32.mrf.mxu0
      %v765 = vadd.f32 %v620, %v764
      %v766 = vpop.f32.mrf.mxu0
      %767 = vmatprep.mubr.f32.mxu0 %v306
      %768 = vmatmul.mubr.f32.gmra.mxu0 %v289
      %v769 = vpop.f32.mrf.mxu0
      %v770 = vadd.f32 %v625, %v769
      %v771 = vpop.f32.mrf.mxu0
      %772 = vmatprep.mubr.f32.mxu0 %v307
      %773 = vmatmul.mubr.f32.gmra.mxu0 %v290
      %v774 = vpop.f32.mrf.mxu0
      %v775 = vadd.f32 %v630, %v774
      %v776 = vpop.f32.mrf.mxu0
      %777 = vmatprep.mubr.f32.mxu0 %v308
      %778 = vmatmul.mubr.f32.gmra.mxu0 %v291
      %v779 = vpop.f32.mrf.mxu0
      %v780 = vadd.f32 %v635, %v779
      %v781 = vpop.f32.mrf.mxu0
      %782 = vmatprep.mubr.f32.mxu0 %v309
      %783 = vmatmul.mubr.f32.gmra.mxu0 %v292
      %v784 = vpop.f32.mrf.mxu0
      %v785 = vadd.f32 %v640, %v784
      %v786 = vpop.f32.mrf.mxu0
      %787 = vmatprep.mubr.f32.mxu0 %v310
      %788 = vmatmul.mubr.f32.gmra.mxu0 %v293
      %v789 = vpop.f32.mrf.mxu0
      %v790 = vadd.f32 %v645, %v789
      %v791 = vpop.f32.mrf.mxu0
      %792 = vmatprep.mubr.f32.mxu0 %v311
      %793 = vmatmul.mubr.f32.gmra.mxu0 %v294
      %v794 = vpop.f32.mrf.mxu0
      %v795 = vadd.f32 %v650, %v794
      %v796 = vpop.f32.mrf.mxu0
      %797 = vmatprep.mubr.f32.mxu0 %v312
      %798 = vmatmul.mubr.f32.gmra.mxu0 %v295
      %v799 = vpop.f32.mrf.mxu0
      %v800 = vadd.f32 %v655, %v799
      %v801 = vpop.f32.mrf.mxu0
      %802 = vmatprep.mubr.f32.mxu0 %v313
      %803 = vmatmul.mubr.f32.gmra.mxu0 %v296
      %v804 = vpop.f32.mrf.mxu0
      %v805 = vadd.f32 %v660, %v804
      %v806 = vpop.f32.mrf.mxu0
      %807 = vmatprep.mubr.f32.mxu0 %v314
      %808 = vmatmul.mubr.f32.gmra.mxu0 %v297
      %v809 = vpop.f32.mrf.mxu0
      %v810 = vadd.f32 %v665, %v809
      %v811 = vpop.f32.mrf.mxu0
      %812 = vmatprep.mubr.f32.mxu0 %v315
      %813 = vmatmul.mubr.f32.gmra.mxu0 %v298
      %v814 = vpop.f32.mrf.mxu0
      %v815 = vadd.f32 %v670, %v814
      %v816 = vpop.f32.mrf.mxu0
      %817 = vmatprep.mubr.f32.mxu0 %v316
      %818 = vmatmul.mubr.f32.gmra.mxu0 %v299
      %v819 = vpop.f32.mrf.mxu0
      %v820 = vadd.f32 %v675, %v819
      %v821 = vpop.f32.mrf.mxu0
      %822 = vmatprep.mubr.f32.mxu0 %v317
      %823 = vmatmul.mubr.f32.gmra.mxu0 %v300
      %v824 = vpop.f32.mrf.mxu0
      %v825 = vadd.f32 %v680, %v824
      %v826 = vpop.f32.mrf.mxu0
      %827 = vmatprep.mubr.f32.mxu0 %v318
      %828 = vmatmul.mubr.f32.gmra.mxu0 %v301
      %v829 = vpop.f32.mrf.mxu0
      %v830 = vadd.f32 %v685, %v829
      %v831 = vpop.f32.mrf.mxu0
      %832 = vmatprep.mubr.f32.mxu0 %v319
      %833 = vmatmul.mubr.f32.gmra.mxu0 %v302
      %v834 = vpop.f32.mrf.mxu0
      %v835 = vadd.f32 %v690, %v834
      %v836 = vpop.f32.mrf.mxu0
      %837 = vmatprep.mubr.f32.mxu0 %v320
      %838 = vmatmul.mubr.f32.gmra.mxu0 %v303
      %v839 = vpop.f32.mrf.mxu0
      %v840 = vadd.f32 %v695, %v839
      %v841 = vpop.f32.mrf.mxu0
      %842 = vdwg.mxu0
      %843 = vmatprep.subr.mxu0 0.0
      %844 = vmatpush1.msra.mxu0 %v481
      %845 = vmatprep.subr.mxu0 0.0
      %846 = vmatpush1.msra.mxu0 %v480
      %847 = vmatprep.subr.mxu0 0.0
      %848 = vmatpush1.msra.mxu0 %v479
      %849 = vmatprep.subr.mxu0 0.0
      %850 = vmatpush1.msra.mxu0 %v478
      %851 = vmatprep.subr.mxu0 0.0
      %852 = vmatpush1.msra.mxu0 %v477
      %853 = vmatprep.subr.mxu0 0.0
      %854 = vmatpush1.msra.mxu0 %v476
      %855 = vmatprep.subr.mxu0 0.0
      %856 = vmatpush1.msra.mxu0 %v475
      %857 = vmatprep.subr.mxu0 0.0
      %858 = vmatpush1.msra.mxu0 %v474
      %859 = vmatprep.subr.mxu0 0.0
      %860 = vmatpush1.msra.mxu0 %v473
      %861 = vmatprep.subr.mxu0 0.0
      %862 = vmatpush1.msra.mxu0 %v472
      %863 = vmatprep.subr.mxu0 0.0
      %864 = vmatpush1.msra.mxu0 %v471
      %865 = vmatprep.subr.mxu0 0.0
      %866 = vmatpush1.msra.mxu0 %v470
      %867 = vmatprep.subr.mxu0 0.0
      %868 = vmatpush1.msra.mxu0 %v469
      %869 = vmatprep.subr.mxu0 0.0
      %870 = vmatpush1.msra.mxu0 %v468
      %871 = vmatprep.subr.mxu0 0.0
      %872 = vmatpush1.msra.mxu0 %v467
      %873 = vmatprep.subr.mxu0 0.0
      %874 = vmatpush1.msra.mxu0 %v466
      %875 = vmatprep.subr.mxu0 0.0
      %876 = vmatpush2.msra.mxu0 %v497
      %877 = vmatprep.subr.mxu0 0.0
      %878 = vmatpush2.msra.mxu0 %v496
      %879 = vmatprep.subr.mxu0 0.0
      %880 = vmatpush2.msra.mxu0 %v495
      %881 = vmatprep.subr.mxu0 0.0
      %882 = vmatpush2.msra.mxu0 %v494
      %883 = vmatprep.subr.mxu0 0.0
      %884 = vmatpush2.msra.mxu0 %v493
      %885 = vmatprep.subr.mxu0 0.0
      %886 = vmatpush2.msra.mxu0 %v492
      %887 = vmatprep.subr.mxu0 0.0
      %888 = vmatpush2.msra.mxu0 %v491
      %889 = vmatprep.subr.mxu0 0.0
      %890 = vmatpush2.msra.mxu0 %v490
      %891 = vmatprep.subr.mxu0 0.0
      %892 = vmatpush2.msra.mxu0 %v489
      %893 = vmatprep.subr.mxu0 0.0
      %894 = vmatpush2.msra.mxu0 %v488
      %895 = vmatprep.subr.mxu0 0.0
      %896 = vmatpush2.msra.mxu0 %v487
      %897 = vmatprep.subr.mxu0 0.0
      %898 = vmatpush2.msra.mxu0 %v486
      %899 = vmatprep.subr.mxu0 0.0
      %900 = vmatpush2.msra.mxu0 %v485
      %901 = vmatprep.subr.mxu0 0.0
      %902 = vmatpush2.msra.mxu0 %v484
      %903 = vmatprep.subr.mxu0 0.0
      %904 = vmatpush2.msra.mxu0 %v483
      %905 = vmatprep.subr.mxu0 0.0
      %906 = vmatpush2.msra.mxu0 %v482
      %907 = vmatprep.mubr.f32.mxu0 %v337
      %908 = vmatmul.mubr.f32.gmra.mxu0 %v321
      %v909 = vpop.f32.mrf.mxu0
      %v910 = vadd.f32 %v765, %v909
      %v911 = vpop.f32.mrf.mxu0
      %912 = vmatprep.mubr.f32.mxu0 %v338
      %913 = vmatmul.mubr.f32.gmra.mxu0 %v322
      %v914 = vpop.f32.mrf.mxu0
      %v915 = vadd.f32 %v770, %v914
      %v916 = vpop.f32.mrf.mxu0
      %917 = vmatprep.mubr.f32.mxu0 %v339
      %918 = vmatmul.mubr.f32.gmra.mxu0 %v323
      %v919 = vpop.f32.mrf.mxu0
      %v920 = vadd.f32 %v775, %v919
      %v921 = vpop.f32.mrf.mxu0
      %922 = vmatprep.mubr.f32.mxu0 %v340
      %923 = vmatmul.mubr.f32.gmra.mxu0 %v324
      %v924 = vpop.f32.mrf.mxu0
      %v925 = vadd.f32 %v780, %v924
      %v926 = vpop.f32.mrf.mxu0
      %927 = vmatprep.mubr.f32.mxu0 %v341
      %928 = vmatmul.mubr.f32.gmra.mxu0 %v325
      %v929 = vpop.f32.mrf.mxu0
      %v930 = vadd.f32 %v785, %v929
      %v931 = vpop.f32.mrf.mxu0
      %932 = vmatprep.mubr.f32.mxu0 %v342
      %933 = vmatmul.mubr.f32.gmra.mxu0 %v326
      %v934 = vpop.f32.mrf.mxu0
      %v935 = vadd.f32 %v790, %v934
      %v936 = vpop.f32.mrf.mxu0
      %937 = vmatprep.mubr.f32.mxu0 %v343
      %938 = vmatmul.mubr.f32.gmra.mxu0 %v327
      %v939 = vpop.f32.mrf.mxu0
      %v940 = vadd.f32 %v795, %v939
      %v941 = vpop.f32.mrf.mxu0
      %942 = vmatprep.mubr.f32.mxu0 %v344
      %943 = vmatmul.mubr.f32.gmra.mxu0 %v328
      %v944 = vpop.f32.mrf.mxu0
      %v945 = vadd.f32 %v800, %v944
      %v946 = vpop.f32.mrf.mxu0
      %947 = vmatprep.mubr.f32.mxu0 %v345
      %948 = vmatmul.mubr.f32.gmra.mxu0 %v329
      %v949 = vpop.f32.mrf.mxu0
      %v950 = vadd.f32 %v805, %v949
      %v951 = vpop.f32.mrf.mxu0
      %952 = vmatprep.mubr.f32.mxu0 %v346
      %953 = vmatmul.mubr.f32.gmra.mxu0 %v330
      %v954 = vpop.f32.mrf.mxu0
      %v955 = vadd.f32 %v810, %v954
      %v956 = vpop.f32.mrf.mxu0
      %957 = vmatprep.mubr.f32.mxu0 %v347
      %958 = vmatmul.mubr.f32.gmra.mxu0 %v331
      %v959 = vpop.f32.mrf.mxu0
      %v960 = vadd.f32 %v815, %v959
      %v961 = vpop.f32.mrf.mxu0
      %962 = vmatprep.mubr.f32.mxu0 %v348
      %963 = vmatmul.mubr.f32.gmra.mxu0 %v332
      %v964 = vpop.f32.mrf.mxu0
      %v965 = vadd.f32 %v820, %v964
      %v966 = vpop.f32.mrf.mxu0
      %967 = vmatprep.mubr.f32.mxu0 %v349
      %968 = vmatmul.mubr.f32.gmra.mxu0 %v333
      %v969 = vpop.f32.mrf.mxu0
      %v970 = vadd.f32 %v825, %v969
      %v971 = vpop.f32.mrf.mxu0
      %972 = vmatprep.mubr.f32.mxu0 %v350
      %973 = vmatmul.mubr.f32.gmra.mxu0 %v334
      %v974 = vpop.f32.mrf.mxu0
      %v975 = vadd.f32 %v830, %v974
      %v976 = vpop.f32.mrf.mxu0
      %977 = vmatprep.mubr.f32.mxu0 %v351
      %978 = vmatmul.mubr.f32.gmra.mxu0 %v335
      %v979 = vpop.f32.mrf.mxu0
      %v980 = vadd.f32 %v835, %v979
      %v981 = vpop.f32.mrf.mxu0
      %982 = vmatprep.mubr.f32.mxu0 %v352
      %983 = vmatmul.mubr.f32.gmra.mxu0 %v336
      %v984 = vpop.f32.mrf.mxu0
      %v985 = vadd.f32 %v840, %v984
      %v986 = vpop.f32.mrf.mxu0
      %987 = vdwg.mxu0
      %988 = vmatprep.subr.mxu0 0.0
      %989 = vmatpush1.msra.mxu0 %v513
      %990 = vmatprep.subr.mxu0 0.0
      %991 = vmatpush1.msra.mxu0 %v512
      %992 = vmatprep.subr.mxu0 0.0
      %993 = vmatpush1.msra.mxu0 %v511
      %994 = vmatprep.subr.mxu0 0.0
      %995 = vmatpush1.msra.mxu0 %v510
      %996 = vmatprep.subr.mxu0 0.0
      %997 = vmatpush1.msra.mxu0 %v509
      %998 = vmatprep.subr.mxu0 0.0
      %999 = vmatpush1.msra.mxu0 %v508
      %1000 = vmatprep.subr.mxu0 0.0
      %1001 = vmatpush1.msra.mxu0 %v507
      %1002 = vmatprep.subr.mxu0 0.0
      %1003 = vmatpush1.msra.mxu0 %v506
      %1004 = vmatprep.subr.mxu0 0.0
      %1005 = vmatpush1.msra.mxu0 %v505
      %1006 = vmatprep.subr.mxu0 0.0
      %1007 = vmatpush1.msra.mxu0 %v504
      %1008 = vmatprep.subr.mxu0 0.0
      %1009 = vmatpush1.msra.mxu0 %v503
      %1010 = vmatprep.subr.mxu0 0.0
      %1011 = vmatpush1.msra.mxu0 %v502
      %1012 = vmatprep.subr.mxu0 0.0
      %1013 = vmatpush1.msra.mxu0 %v501
      %1014 = vmatprep.subr.mxu0 0.0
      %1015 = vmatpush1.msra.mxu0 %v500
      %1016 = vmatprep.subr.mxu0 0.0
      %1017 = vmatpush1.msra.mxu0 %v499
      %1018 = vmatprep.subr.mxu0 0.0
      %1019 = vmatpush1.msra.mxu0 %v498
      %1020 = vmatprep.subr.mxu0 0.0
      %1021 = vmatpush2.msra.mxu0 %v529
      %1022 = vmatprep.subr.mxu0 0.0
      %1023 = vmatpush2.msra.mxu0 %v528
      %1024 = vmatprep.subr.mxu0 0.0
      %1025 = vmatpush2.msra.mxu0 %v527
      %1026 = vmatprep.subr.mxu0 0.0
      %1027 = vmatpush2.msra.mxu0 %v526
      %1028 = vmatprep.subr.mxu0 0.0
      %1029 = vmatpush2.msra.mxu0 %v525
      %1030 = vmatprep.subr.mxu0 0.0
      %1031 = vmatpush2.msra.mxu0 %v524
      %1032 = vmatprep.subr.mxu0 0.0
      %1033 = vmatpush2.msra.mxu0 %v523
      %1034 = vmatprep.subr.mxu0 0.0
      %1035 = vmatpush2.msra.mxu0 %v522
      %1036 = vmatprep.subr.mxu0 0.0
      %1037 = vmatpush2.msra.mxu0 %v521
      %1038 = vmatprep.subr.mxu0 0.0
      %1039 = vmatpush2.msra.mxu0 %v520
      %1040 = vmatprep.subr.mxu0 0.0
      %1041 = vmatpush2.msra.mxu0 %v519
      %1042 = vmatprep.subr.mxu0 0.0
      %1043 = vmatpush2.msra.mxu0 %v518
      %1044 = vmatprep.subr.mxu0 0.0
      %1045 = vmatpush2.msra.mxu0 %v517
      %1046 = vmatprep.subr.mxu0 0.0
      %1047 = vmatpush2.msra.mxu0 %v516
      %1048 = vmatprep.subr.mxu0 0.0
      %1049 = vmatpush2.msra.mxu0 %v515
      %1050 = vmatprep.subr.mxu0 0.0
      %1051 = vmatpush2.msra.mxu0 %v514
      %1052 = vmatprep.mubr.f32.mxu0 %v370
      %1053 = vmatmul.mubr.f32.gmra.mxu0 %v354
      %v1054 = vpop.f32.mrf.mxu0
      %v1055 = vadd.f32 %v910, %v1054
      %v1056 = vpop.f32.mrf.mxu0
      %1057 = vmatprep.mubr.f32.mxu0 %v371
      %1058 = vmatmul.mubr.f32.gmra.mxu0 %v355
      %v1059 = vpop.f32.mrf.mxu0
      %v1060 = vadd.f32 %v915, %v1059
      %v1061 = vpop.f32.mrf.mxu0
      %1062 = vmatprep.mubr.f32.mxu0 %v372
      %1063 = vmatmul.mubr.f32.gmra.mxu0 %v356
      %v1064 = vpop.f32.mrf.mxu0
      %v1065 = vadd.f32 %v920, %v1064
      %v1066 = vpop.f32.mrf.mxu0
      %1067 = vmatprep.mubr.f32.mxu0 %v373
      %1068 = vmatmul.mubr.f32.gmra.mxu0 %v357
      %v1069 = vpop.f32.mrf.mxu0
      %v1070 = vadd.f32 %v925, %v1069
      %v1071 = vpop.f32.mrf.mxu0
      %1072 = vmatprep.mubr.f32.mxu0 %v374
      %1073 = vmatmul.mubr.f32.gmra.mxu0 %v358
      %v1074 = vpop.f32.mrf.mxu0
      %v1075 = vadd.f32 %v930, %v1074
      %v1076 = vpop.f32.mrf.mxu0
      %1077 = vmatprep.mubr.f32.mxu0 %v375
      %1078 = vmatmul.mubr.f32.gmra.mxu0 %v359
      %v1079 = vpop.f32.mrf.mxu0
      %v1080 = vadd.f32 %v935, %v1079
      %v1081 = vpop.f32.mrf.mxu0
      %1082 = vmatprep.mubr.f32.mxu0 %v376
      %1083 = vmatmul.mubr.f32.gmra.mxu0 %v360
      %v1084 = vpop.f32.mrf.mxu0
      %v1085 = vadd.f32 %v940, %v1084
      %v1086 = vpop.f32.mrf.mxu0
      %1087 = vmatprep.mubr.f32.mxu0 %v377
      %1088 = vmatmul.mubr.f32.gmra.mxu0 %v361
      %v1089 = vpop.f32.mrf.mxu0
      %v1090 = vadd.f32 %v945, %v1089
      %v1091 = vpop.f32.mrf.mxu0
      %1092 = vmatprep.mubr.f32.mxu0 %v378
      %1093 = vmatmul.mubr.f32.gmra.mxu0 %v362
      %v1094 = vpop.f32.mrf.mxu0
      %v1095 = vadd.f32 %v950, %v1094
      %v1096 = vpop.f32.mrf.mxu0
      %1097 = vmatprep.mubr.f32.mxu0 %v379
      %1098 = vmatmul.mubr.f32.gmra.mxu0 %v363
      %v1099 = vpop.f32.mrf.mxu0
      %v1100 = vadd.f32 %v955, %v1099
      %v1101 = vpop.f32.mrf.mxu0
      %1102 = vmatprep.mubr.f32.mxu0 %v380
      %1103 = vmatmul.mubr.f32.gmra.mxu0 %v364
      %v1104 = vpop.f32.mrf.mxu0
      %v1105 = vadd.f32 %v960, %v1104
      %v1106 = vpop.f32.mrf.mxu0
      %1107 = vmatprep.mubr.f32.mxu0 %v381
      %1108 = vmatmul.mubr.f32.gmra.mxu0 %v365
      %v1109 = vpop.f32.mrf.mxu0
      %v1110 = vadd.f32 %v965, %v1109
      %v1111 = vpop.f32.mrf.mxu0
      %1112 = vmatprep.mubr.f32.mxu0 %v382
      %1113 = vmatmul.mubr.f32.gmra.mxu0 %v366
      %v1114 = vpop.f32.mrf.mxu0
      %v1115 = vadd.f32 %v970, %v1114
      %v1116 = vpop.f32.mrf.mxu0
      %1117 = vmatprep.mubr.f32.mxu0 %v383
      %1118 = vmatmul.mubr.f32.gmra.mxu0 %v367
      %v1119 = vpop.f32.mrf.mxu0
      %v1120 = vadd.f32 %v975, %v1119
      %v1121 = vpop.f32.mrf.mxu0
      %1122 = vmatprep.mubr.f32.mxu0 %v384
      %1123 = vmatmul.mubr.f32.gmra.mxu0 %v368
      %v1124 = vpop.f32.mrf.mxu0
      %v1125 = vadd.f32 %v980, %v1124
      %v1126 = vpop.f32.mrf.mxu0
      %1127 = vmatprep.mubr.f32.mxu0 %v385
      %1128 = vmatmul.mubr.f32.gmra.mxu0 %v369
      %v1129 = vpop.f32.mrf.mxu0
      %v1130 = vadd.f32 %v985, %v1129
      %v1131 = vpop.f32.mrf.mxu0
      %1132 = vdwg.mxu0
      %1133 = vmatprep.subr.mxu0 0.0
      %1134 = vmatpush1.msra.mxu0 %v545
      %1135 = vmatprep.subr.mxu0 0.0
      %1136 = vmatpush1.msra.mxu0 %v544
      %1137 = vmatprep.subr.mxu0 0.0
      %1138 = vmatpush1.msra.mxu0 %v543
      %1139 = vmatprep.subr.mxu0 0.0
      %1140 = vmatpush1.msra.mxu0 %v542
      %1141 = vmatprep.subr.mxu0 0.0
      %1142 = vmatpush1.msra.mxu0 %v541
      %1143 = vmatprep.subr.mxu0 0.0
      %1144 = vmatpush1.msra.mxu0 %v540
      %1145 = vmatprep.subr.mxu0 0.0
      %1146 = vmatpush1.msra.mxu0 %v539
      %1147 = vmatprep.subr.mxu0 0.0
      %1148 = vmatpush1.msra.mxu0 %v538
      %1149 = vmatprep.subr.mxu0 0.0
      %1150 = vmatpush1.msra.mxu0 %v537
      %1151 = vmatprep.subr.mxu0 0.0
      %1152 = vmatpush1.msra.mxu0 %v536
      %1153 = vmatprep.subr.mxu0 0.0
      %1154 = vmatpush1.msra.mxu0 %v535
      %1155 = vmatprep.subr.mxu0 0.0
      %1156 = vmatpush1.msra.mxu0 %v534
      %1157 = vmatprep.subr.mxu0 0.0
      %1158 = vmatpush1.msra.mxu0 %v533
      %1159 = vmatprep.subr.mxu0 0.0
      %1160 = vmatpush1.msra.mxu0 %v532
      %1161 = vmatprep.subr.mxu0 0.0
      %1162 = vmatpush1.msra.mxu0 %v531
      %1163 = vmatprep.subr.mxu0 0.0
      %1164 = vmatpush1.msra.mxu0 %v530
      %1165 = vmatprep.subr.mxu0 0.0
      %1166 = vmatpush2.msra.mxu0 0.0
      %1167 = vmatprep.subr.mxu0 0.0
      %1168 = vmatpush2.msra.mxu0 0.0
      %1169 = vmatprep.subr.mxu0 0.0
      %1170 = vmatpush2.msra.mxu0 0.0
      %1171 = vmatprep.subr.mxu0 0.0
      %1172 = vmatpush2.msra.mxu0 0.0
      %1173 = vmatprep.subr.mxu0 0.0
      %1174 = vmatpush2.msra.mxu0 0.0
      %1175 = vmatprep.subr.mxu0 0.0
      %1176 = vmatpush2.msra.mxu0 0.0
      %1177 = vmatprep.subr.mxu0 0.0
      %1178 = vmatpush2.msra.mxu0 0.0
      %1179 = vmatprep.subr.mxu0 0.0
      %1180 = vmatpush2.msra.mxu0 0.0
      %1181 = vmatprep.subr.mxu0 0.0
      %1182 = vmatpush2.msra.mxu0 0.0
      %1183 = vmatprep.subr.mxu0 0.0
      %1184 = vmatpush2.msra.mxu0 0.0
      %1185 = vmatprep.subr.mxu0 0.0
      %1186 = vmatpush2.msra.mxu0 0.0
      %1187 = vmatprep.subr.mxu0 0.0
      %1188 = vmatpush2.msra.mxu0 0.0
      %1189 = vmatprep.subr.mxu0 0.0
      %1190 = vmatpush2.msra.mxu0 0.0
      %1191 = vmatprep.subr.mxu0 0.0
      %1192 = vmatpush2.msra.mxu0 0.0
      %1193 = vmatprep.subr.mxu0 0.0
      %1194 = vmatpush2.msra.mxu0 0.0
      %1195 = vmatprep.subr.mxu0 0.0
      %1196 = vmatpush2.msra.mxu0 0.0
      %1197 = vmatprep.mubr.f32.mxu0 0.0
      %1198 = vmatmul.mubr.f32.gmra.mxu0 %v386
      %v1199 = vpop.f32.mrf.mxu0
      %v1200 = vadd.f32 %v1055, %v1199
      %v1201 = vpop.f32.mrf.mxu0
      %1202 = vmatprep.mubr.f32.mxu0 0.0
      %1203 = vmatmul.mubr.f32.gmra.mxu0 %v387
      %v1204 = vpop.f32.mrf.mxu0
      %v1205 = vadd.f32 %v1060, %v1204
      %v1206 = vpop.f32.mrf.mxu0
      %1207 = vmatprep.mubr.f32.mxu0 0.0
      %1208 = vmatmul.mubr.f32.gmra.mxu0 %v388
      %v1209 = vpop.f32.mrf.mxu0
      %v1210 = vadd.f32 %v1065, %v1209
      %v1211 = vpop.f32.mrf.mxu0
      %1212 = vmatprep.mubr.f32.mxu0 0.0
      %1213 = vmatmul.mubr.f32.gmra.mxu0 %v389
      %v1214 = vpop.f32.mrf.mxu0
      %v1215 = vadd.f32 %v1070, %v1214
      %v1216 = vpop.f32.mrf.mxu0
      %1217 = vmatprep.mubr.f32.mxu0 0.0
      %1218 = vmatmul.mubr.f32.gmra.mxu0 %v390
      %v1219 = vpop.f32.mrf.mxu0
      %v1220 = vadd.f32 %v1075, %v1219
      %v1221 = vpop.f32.mrf.mxu0
      %1222 = vmatprep.mubr.f32.mxu0 0.0
      %1223 = vmatmul.mubr.f32.gmra.mxu0 %v391
      %v1224 = vpop.f32.mrf.mxu0
      %v1225 = vadd.f32 %v1080, %v1224
      %v1226 = vpop.f32.mrf.mxu0
      %1227 = vmatprep.mubr.f32.mxu0 0.0
      %1228 = vmatmul.mubr.f32.gmra.mxu0 %v392
      %v1229 = vpop.f32.mrf.mxu0
      %v1230 = vadd.f32 %v1085, %v1229
      %v1231 = vpop.f32.mrf.mxu0
      %1232 = vmatprep.mubr.f32.mxu0 0.0
      %1233 = vmatmul.mubr.f32.gmra.mxu0 %v393
      %v1234 = vpop.f32.mrf.mxu0
      %v1235 = vadd.f32 %v1090, %v1234
      %v1236 = vpop.f32.mrf.mxu0
      %1237 = vmatprep.mubr.f32.mxu0 0.0
      %1238 = vmatmul.mubr.f32.gmra.mxu0 %v394
      %v1239 = vpop.f32.mrf.mxu0
      %v1240 = vadd.f32 %v1095, %v1239
      %v1241 = vpop.f32.mrf.mxu0
      %1242 = vmatprep.mubr.f32.mxu0 0.0
      %1243 = vmatmul.mubr.f32.gmra.mxu0 %v395
      %v1244 = vpop.f32.mrf.mxu0
      %v1245 = vadd.f32 %v1100, %v1244
      %v1246 = vpop.f32.mrf.mxu0
      %1247 = vmatprep.mubr.f32.mxu0 0.0
      %1248 = vmatmul.mubr.f32.gmra.mxu0 %v396
      %v1249 = vpop.f32.mrf.mxu0
      %v1250 = vadd.f32 %v1105, %v1249
      %v1251 = vpop.f32.mrf.mxu0
      %1252 = vmatprep.mubr.f32.mxu0 0.0
      %1253 = vmatmul.mubr.f32.gmra.mxu0 %v397
      %v1254 = vpop.f32.mrf.mxu0
      %v1255 = vadd.f32 %v1110, %v1254
      %v1256 = vpop.f32.mrf.mxu0
      %1257 = vmatprep.mubr.f32.mxu0 0.0
      %1258 = vmatmul.mubr.f32.gmra.mxu0 %v398
      %v1259 = vpop.f32.mrf.mxu0
      %v1260 = vadd.f32 %v1115, %v1259
      %v1261 = vpop.f32.mrf.mxu0
      %1262 = vmatprep.mubr.f32.mxu0 0.0
      %1263 = vmatmul.mubr.f32.gmra.mxu0 %v399
      %v1264 = vpop.f32.mrf.mxu0
      %v1265 = vadd.f32 %v1120, %v1264
      %v1266 = vpop.f32.mrf.mxu0
      %1267 = vmatprep.mubr.f32.mxu0 0.0
      %1268 = vmatmul.mubr.f32.gmra.mxu0 %v400
      %v1269 = vpop.f32.mrf.mxu0
      %v1270 = vadd.f32 %v1125, %v1269
      %v1271 = vpop.f32.mrf.mxu0
      %1272 = vmatprep.mubr.f32.mxu0 0.0
      %1273 = vmatmul.mubr.f32.gmra.mxu0 %v401
      %v1274 = vpop.f32.mrf.mxu0
      %v1275 = vadd.f32 %v1130, %v1274
      %v1276 = vpop.f32.mrf.mxu0
      %1277 = vdwg.mxu0
      %v1278 = vmax.f32 %v1200, 0.0
      %v1279 = vmax.f32 %v1205, 0.0
      %v1280 = vmax.f32 %v1210, 0.0
      %v1281 = vmax.f32 %v1215, 0.0
      %v1282 = vmax.f32 %v1220, 0.0
      %v1283 = vmax.f32 %v1225, 0.0
      %v1284 = vmax.f32 %v1230, 0.0
      %v1285 = vmax.f32 %v1235, 0.0
      %v1286 = vmax.f32 %v1240, 0.0
      %v1287 = vmax.f32 %v1245, 0.0
      %v1288 = vmax.f32 %v1250, 0.0
      %v1289 = vmax.f32 %v1255, 0.0
      %v1290 = vmax.f32 %v1260, 0.0
      %v1291 = vmax.f32 %v1265, 0.0
      %v1292 = vmax.f32 %v1270, 0.0
      %v1293 = vmax.f32 %v1275, 0.0
      %1294 = vst [vmem:[%s254] sm:$0xff] %v1278
      %1295 = vst [vmem:[%s254 + $0x8] sm:$0xff] %v1279
      %1296 = vst [vmem:[%s254 + $0x10] sm:$0xff] %v1280
      %1297 = vst [vmem:[%s254 + $0x18] sm:$0xff] %v1281
      %1298 = vst [vmem:[%s254 + $0x20] sm:$0xff] %v1282
      %1299 = vst [vmem:[%s254 + $0x28] sm:$0xff] %v1283
      %1300 = vst [vmem:[%s254 + $0x30] sm:$0xff] %v1284
      %1301 = vst [vmem:[%s254 + $0x38] sm:$0xff] %v1285
      %1302 = vst [vmem:[%s254 + $0x40] sm:$0xff] %v1286
      %1303 = vst [vmem:[%s254 + $0x48] sm:$0xff] %v1287
      %1304 = vst [vmem:[%s254 + $0x50] sm:$0xff] %v1288
      %1305 = vst [vmem:[%s254 + $0x58] sm:$0xff] %v1289
      %1306 = vst [vmem:[%s254 + $0x60] sm:$0xff] %v1290
      %1307 = vst [vmem:[%s254 + $0x68] sm:$0xff] %v1291
      %1308 = vst [vmem:[%s254 + $0x70] sm:$0xff] %v1292
      %1309 = vst [vmem:[%s254 + $0x78] sm:$0xff] %v1293
      %s1310 = smul.u32 8, %s20
      %p1311 = scmp.lt.s32.totalorder %s19, 1
      %s1312 = scalar_select %p1311, %s19, 1
      %p1313 = scmp.lt.s32.totalorder %s1310, 15
      %s1314 = scalar_select %p1313, %s1310, 15
      %p1315 = scmp.lt.s32.totalorder %s21, 0
      %s1316 = scalar_select %p1315, %s21, 0
      %s1317 = smul.addr %s1314, 2
      %s1318 = sadd.s32 %s1316, %s1317
      %s1319 = smul.addr %s1312, 32
      %s1320 = sadd.s32 %s1318, %s1319
      %s1321 = smul.addr %s1320, 8
      %s1322 = scalar_lea.vmem %s3, %s1321
      // Predicated region
      $region33: #{basic_conv2d.1} parent=31 // pred_check
        %p1323 = pneg %p135
      $region34: #{basic_conv2d.1} parent=31 // pred_check_branch
        %1325 = sbr.rel (%p1323) target = $region36
      $region35: #{basic_conv2d.1} parent=31 // pred_region
        %s1326 = smul.u32 8, %s20
      $region36: #{basic_conv2d.1} parent=31 // pred_fallthru
        _
    $region32: #{basic_conv2d.1} parent=5 // pred_fallthru
      _
    %p1327 = scmp.le.s32.totalorder 2, %s9
    // Predicated region
    $region37: #{basic_conv2d.1} parent=5 // pred_check
      %p1328 = pneg %p1327
    $region38: #{basic_conv2d.1} parent=5 // pred_check_branch
      %1330 = sbr.rel (%p1328) target = $region40
    $region39: #{basic_conv2d.1} parent=5 // pred_region
      %s1331 = ssub.s32 %s9, 2
      // Predicated region
      $region41: #{basic_conv2d.1} parent=39 // pred_check
        %p1332 = pneg %p141
      $region42: #{basic_conv2d.1} parent=39 // pred_check_branch
        %1334 = sbr.rel (%p1332) target = $region44
      $region43: #{basic_conv2d.1} parent=39 // pred_region
        %s1335 = smul.u32 8, %s23
        %p1336 = scmp.lt.s32.totalorder %s22, 1
        %s1337 = scalar_select %p1336, %s22, 1
        %p1338 = scmp.lt.s32.totalorder %s1335, 15
        %s1339 = scalar_select %p1338, %s1335, 15
        %p1340 = scmp.lt.s32.totalorder %s24, 0
        %s1341 = scalar_select %p1340, %s24, 0
        %s1342 = smul.addr %s1339, 2
        %s1343 = sadd.s32 %s1341, %s1342
        %s1344 = smul.addr %s1337, 32
        %s1345 = sadd.s32 %s1343, %s1344
        %s1346 = smul.addr %s1345, 8
        %s1347 = scalar_lea.vmem %s3, %s1346
      $region44: #{basic_conv2d.1} parent=39 // pred_fallthru
        _
    $region40: #{basic_conv2d.1} parent=5 // pred_fallthru
      _
  $region6: #{basic_conv2d.1} parent=0 // loop_footer
    %s13 = sadd.s32 1, %s9
  $region7: #{basic_conv2d.1} parent=0 // loop_footer_branch
    %8 = sbr.rel target = $region3
  $region8: #{basic_conv2d.1} parent=0 // loop_exit
    _

</llo_original>
